<compile_context>
chip_gen: v5e
topology: v5e:2x2
jax: 0.10.0
libtpu: 0.0.40
codegen_flags: <defaults>
</compile_context>

<pallas_src>
import numpy as np
import jax
import jax.numpy as jnp
from jax.experimental import pallas as pl
from jax.experimental.pallas import tpu as pltpu

# ---------------- problem sizes (derived from the module) ----------------
N_VEH = 4
N_RB = N_VEH
N_POWER_LEVELS = 3                                               # len(V2V_power_dB_List)
N_INPUT = N_RB + N_VEH * N_RB + N_RB + 1 + N_VEH + 1 + 1 + 2     # = 33
N_HIDDEN_1 = 500
N_HIDDEN_2 = 250
N_HIDDEN_3 = 120
N_OUTPUT = N_RB * N_POWER_LEVELS                                 # = 12
BN_EPS = 1e-5

# lane-padded (multiple-of-128) feature dims
H1P, H2P, H3P, OUT_PAD = 512, 256, 128, 128
P_MAX = H1P          # lane width of the packed small-parameter array
N_P_ROWS = 8         # one (8, 512) sublane tile: g1, be1, g2, be2, g3, be3, b4, pad


def dqn_kernel(x_ref, w1_ref, w2_ref, w3_ref, w4_ref, p_ref, o_ref):
    """p_ref rows: 0:g1 1:be1 2:g2 3:be2 4:g3 5:be3 6:b4 7:<zero pad>."""
    # Cast the input to bf16 once; hidden activations are re-cast per layer
    # because BN math is kept in f32.
    x = x_ref[...].astype(jnp.bfloat16)                       # (B, 33)
    inv_b = 1.0 / x_ref.shape[0]                              # trace-time const

    def lin(h_bf16, w_ref):
        # bf16 x bf16 on the MXU, f32 accumulation.
        return jnp.dot(h_bf16, w_ref[...], preferred_element_type=jnp.float32)

    def bn(h, gamma, beta):
        # Training-mode BatchNorm1d over the batch, fused single reduction
        # pass (sum and sum-of-squares), folded scale/shift FMA epilogue.
        s1 = jnp.sum(h, axis=0, keepdims=True)                # (1, F)
        s2 = jnp.sum(h * h, axis=0, keepdims=True)            # (1, F)
        mu = s1 * inv_b
        var = jnp.maximum(s2 * inv_b - mu * mu, 0.0)          # biased (1/N)
        scale = gamma * jax.lax.rsqrt(var + BN_EPS)           # (1, F)
        shift = beta - mu * scale                             # (1, F)
        return h * scale + shift

    # Pre-BN biases omitted on layers 1-3: they cancel exactly in h - mean(h).
    h = lin(x, w1_ref)                                        # (B, 512) f32
    h = bn(h, p_ref[0:1, :H1P], p_ref[1:2, :H1P])

    h = lin(h.astype(jnp.bfloat16), w2_ref)                   # (B, 256)
    h = bn(h, p_ref[2:3, :H2P], p_ref[3:4, :H2P])

    h = lin(h.astype(jnp.bfloat16), w3_ref)                   # (B, 128)
    h = bn(h, p_ref[4:5, :H3P], p_ref[5:6, :H3P])

    h = lin(h.astype(jnp.bfloat16), w4_ref) + p_ref[6:7, :OUT_PAD]  # (B, 128)
    o_ref[...] = jnp.maximum(h, 0.0)


def dqn_forward(x, w1, w2, w3, w4, p):
    """x: (n_batches, B, N_INPUT) f32; w*: bf16 padded (in,out); p: (8, 512) f32.

    Each grid program processes one independent batch (BN stats per batch).
    The batch axis is 'parallel' so v7x shards it across both TensorCores;
    weight BlockSpecs have constant index maps so weights remain VMEM-resident
    across grid iterations (weight DMA paid once per call).
    """
    nb, B, _ = x.shape
    const2 = lambda b: (0, 0)
    out = pl.pallas_call(
        dqn_kernel,
        out_shape=jax.ShapeDtypeStruct((nb, B, OUT_PAD), jnp.float32),
        grid=(nb,),
        in_specs=[
            pl.BlockSpec((pl.Squeezed(), B, N_INPUT), lambda b: (b, 0, 0)),
            pl.BlockSpec((N_INPUT, H1P), const2),
            pl.BlockSpec((H1P, H2P), const2),
            pl.BlockSpec((H2P, H3P), const2),
            pl.BlockSpec((H3P, OUT_PAD), const2),
            pl.BlockSpec((N_P_ROWS, P_MAX), const2),
        ],
        out_specs=pl.BlockSpec((pl.Squeezed(), B, OUT_PAD), lambda b: (b, 0, 0)),
        compiler_params=pltpu.CompilerParams(
            dimension_semantics=("parallel",)),
    )(x, w1, w2, w3, w4, p)
    # Drop the zero lane padding. (Consumers that accept the lane-padded
    # (nb, B, 128) slab can skip this slice and avoid one extra HBM copy.)
    return out[..., :N_OUTPUT]


def init_params(key):
    """Synthetic PyTorch-like init; weights padded+zero-filled, cast to bf16.

    Returns (w1, w2, w3, w4, p) where p packs [g1, be1, g2, be2, g3, be3, b4]
    as rows 0..6 of an (8, 512) f32 array (row 7 is zero padding).

    NOTE: biases for layers 1-3 are NOT generated — they cancel exactly under
    training-mode BatchNorm (h - mean(h)), so they never affect the output.

    IMPORTANT: gamma/beta MUST be zero in the padded lanes (columns >= the real
    feature width).  Padded activation columns are exactly 0 after each matmul
    (zero-padded weight columns); BN keeps them at 0 only because
    scale = gamma * rsqrt(0 + eps) has gamma = 0 and beta_pad = 0.  Padding
    gamma with ones would silently pollute the padded columns.
    """
    real = [(N_INPUT, N_HIDDEN_1), (N_HIDDEN_1, N_HIDDEN_2),
            (N_HIDDEN_2, N_HIDDEN_3), (N_HIDDEN_3, N_OUTPUT)]
    padded = [(N_INPUT, H1P), (H1P, H2P), (H2P, H3P), (H3P, OUT_PAD)]
    keys = jax.random.split(key, 8)

    def pad_row(v, n):
        return jnp.zeros((P_MAX,), jnp.float32).at[:n].set(v)

    ws, rows = [], []
    for li, ((fin, fout), (pin, pout)) in enumerate(zip(real, padded)):
        kw, kb = keys[2 * li], keys[2 * li + 1]
        bound = 1.0 / np.sqrt(fin)
        w = jax.random.uniform(kw, (fin, fout), jnp.float32, -bound, bound)
        w_pad = jnp.zeros((pin, pout), jnp.float32).at[:fin, :fout].set(w)
        ws.append(w_pad.astype(jnp.bfloat16))
        if li < 3:                                             # BN after layers 1-3
            rows.append(pad_row(jnp.ones((fout,), jnp.float32), fout))   # gamma
            rows.append(pad_row(jnp.zeros((fout,), jnp.float32), fout))  # beta
        else:                                                  # last layer keeps bias
            b = jax.random.uniform(kb, (fout,), jnp.float32, -bound, bound)
            rows.append(pad_row(b, fout))                      # b4
    rows.append(jnp.zeros((P_MAX,), jnp.float32))              # pad to 8 rows
    p = jnp.stack(rows, axis=0)                                # (8, 512)

    # Guard: padded gamma/beta lanes must stay zero (see docstring).
    assert np.all(np.asarray(p[0, N_HIDDEN_1:]) == 0.0)
    assert np.all(np.asarray(p[2, N_HIDDEN_2:]) == 0.0)
    assert np.all(np.asarray(p[4, N_HIDDEN_3:]) == 0.0)
    return ws[0], ws[1], ws[2], ws[3], p


def dqn_reference(x, w1, w2, w3, w4, p):
    """Pure-JAX reference (two-pass BN variance) with the same precision policy."""
    def lin(h, w):
        return jnp.dot(h.astype(jnp.bfloat16), w, preferred_element_type=jnp.float32)

    def bn(h, gamma, beta):
        mu = jnp.mean(h, axis=0, keepdims=True)
        d = h - mu
        var = jnp.mean(d * d, axis=0, keepdims=True)
        return d * (gamma * jax.lax.rsqrt(var + BN_EPS)) + beta

    outs = []
    for xb in x:                                               # per independent batch
        h = lin(xb, w1)
        h = bn(h, p[0:1, :H1P], p[1:2, :H1P])
        h = lin(h, w2)
        h = bn(h, p[2:3, :H2P], p[3:4, :H2P])
        h = lin(h, w3)
        h = bn(h, p[4:5, :H3P], p[5:6, :H3P])
        h = lin(h, w4) + p[6:7, :OUT_PAD]
        outs.append(jnp.maximum(h, 0.0)[:, :N_OUTPUT])
    return jnp.stack(outs, axis=0)


if __name__ == "__main__":
    key = jax.random.PRNGKey(0)
    k_params, k_x = jax.random.split(key)

    # Two independent batches of 128 states (e.g. all vehicle/neighbor pairs
    # over consecutive env steps).  The leading axis becomes the parallel grid
    # (both v7x TensorCores engaged); B is a multiple of 8 and amortizes the
    # ~0.4 MB weight DMA.  On v6e/v7x, B can be raised toward 256 to fill the
    # 256-wide MXU M dimension if the RL loop permits.
    N_BATCHES, B = 2, 128
    w1, w2, w3, w4, p = init_params(k_params)
    x = jax.random.normal(k_x, (N_BATCHES, B, N_INPUT), jnp.float32)

    out = jax.block_until_ready(dqn_forward(x, w1, w2, w3, w4, p))
    ref = jax.block_until_ready(dqn_reference(x, w1, w2, w3, w4, p))

    assert out.shape == (N_BATCHES, B, N_OUTPUT)
    np.testing.assert_allclose(np.asarray(out), np.asarray(ref),
                               rtol=5e-3, atol=5e-3)
    print("KERNEL_OK")
</pallas_src>

<mosaic_0001>
module attributes {stable_mosaic.version = 11 : i64} {
  func.func @dqn_kernel(%arg0: i32, %arg1: memref<1x128x33xf32, #tpu.memory_space<vmem>>, %arg2: memref<33x512xbf16, #tpu.memory_space<vmem>>, %arg3: memref<512x256xbf16, #tpu.memory_space<vmem>>, %arg4: memref<256x128xbf16, #tpu.memory_space<vmem>>, %arg5: memref<128x128xbf16, #tpu.memory_space<vmem>>, %arg6: memref<8x512xf32, #tpu.memory_space<vmem>>, %arg7: memref<1x128x128xf32, #tpu.memory_space<vmem>>) attributes {dimension_semantics = [#tpu.dimension_semantics<parallel>], iteration_bounds = array<i64: 2>, scalar_prefetch = 0 : i64, scratch_operands = 0 : i64, tpu.core_type = #tpu.core_type<tc>, window_params = [{transform_indices = @transform_0, window_bounds = array<i64: 1, 128, 33>}, {pipeline_mode = #tpu.pipeline_mode<synchronous>, transform_indices = @transform_1, window_bounds = array<i64: 33, 512>}, {pipeline_mode = #tpu.pipeline_mode<synchronous>, transform_indices = @transform_2, window_bounds = array<i64: 512, 256>}, {pipeline_mode = #tpu.pipeline_mode<synchronous>, transform_indices = @transform_3, window_bounds = array<i64: 256, 128>}, {pipeline_mode = #tpu.pipeline_mode<synchronous>, transform_indices = @transform_4, window_bounds = array<i64: 128, 128>}, {pipeline_mode = #tpu.pipeline_mode<synchronous>, transform_indices = @transform_5, window_bounds = array<i64: 8, 512>}, {transform_indices = @transform_6, window_bounds = array<i64: 1, 128, 128>}]} {
    %c0 = arith.constant 0 : index
    %c0_0 = arith.constant 0 : index
    %c0_1 = arith.constant 0 : index
    %0 = vector.load %arg1[%c0, %c0_0, %c0_1] : memref<1x128x33xf32, #tpu.memory_space<vmem>>, vector<1x128x33xf32>
    %1 = vector.shape_cast %0 : vector<1x128x33xf32> to vector<128x33xf32>
    %2 = arith.truncf %1 : vector<128x33xf32> to vector<128x33xbf16>
    %c0_2 = arith.constant 0 : index
    %c0_3 = arith.constant 0 : index
    %3 = vector.load %arg2[%c0_2, %c0_3] : memref<33x512xbf16, #tpu.memory_space<vmem>>, vector<33x512xbf16>
    %cst = arith.constant dense<0.000000e+00> : vector<128x512xf32>
    %4 = tpu.matmul %2, %3, %cst {dimension_numbers = #tpu.dot_dimension_numbers<[1], [0], [0], [1], [0, 0, 1, 1], [], []>} : vector<128x33xbf16>, vector<33x512xbf16>, vector<128x512xf32> -> vector<128x512xf32>
    %c0_4 = arith.constant 0 : index
    %c0_5 = arith.constant 0 : index
    %5 = vector.load %arg6[%c0_4, %c0_5] : memref<8x512xf32, #tpu.memory_space<vmem>>, vector<1x512xf32>
    %c1 = arith.constant 1 : index
    %c0_6 = arith.constant 0 : index
    %6 = vector.load %arg6[%c1, %c0_6] : memref<8x512xf32, #tpu.memory_space<vmem>>, vector<1x512xf32>
    %cst_7 = arith.constant dense<0.000000e+00> : vector<512xf32>
    %7 = vector.multi_reduction <add>, %4, %cst_7 [0] : vector<128x512xf32> to vector<512xf32>
    %8 = vector.shape_cast %7 : vector<512xf32> to vector<1x512xf32>
    %9 = arith.mulf %4, %4 : vector<128x512xf32>
    %cst_8 = arith.constant dense<0.000000e+00> : vector<512xf32>
    %10 = vector.multi_reduction <add>, %9, %cst_8 [0] : vector<128x512xf32> to vector<512xf32>
    %11 = vector.shape_cast %10 : vector<512xf32> to vector<1x512xf32>
    %cst_9 = arith.constant 7.812500e-03 : f32
    %12 = vector.broadcast %cst_9 : f32 to vector<1x512xf32>
    %13 = arith.mulf %8, %12 : vector<1x512xf32>
    %cst_10 = arith.constant 7.812500e-03 : f32
    %14 = vector.broadcast %cst_10 : f32 to vector<1x512xf32>
    %15 = arith.mulf %11, %14 : vector<1x512xf32>
    %16 = arith.mulf %13, %13 : vector<1x512xf32>
    %17 = arith.subf %15, %16 : vector<1x512xf32>
    %cst_11 = arith.constant 0.000000e+00 : f32
    %18 = vector.broadcast %cst_11 : f32 to vector<1x512xf32>
    %19 = arith.maximumf %17, %18 : vector<1x512xf32>
    %cst_12 = arith.constant 9.99999974E-6 : f32
    %20 = vector.broadcast %cst_12 : f32 to vector<1x512xf32>
    %21 = arith.addf %19, %20 : vector<1x512xf32>
    %22 = math.rsqrt %21 : vector<1x512xf32>
    %23 = arith.mulf %5, %22 : vector<1x512xf32>
    %24 = arith.mulf %13, %23 : vector<1x512xf32>
    %25 = arith.subf %6, %24 : vector<1x512xf32>
    %26 = vector.broadcast %23 : vector<1x512xf32> to vector<128x512xf32>
    %27 = arith.mulf %4, %26 : vector<128x512xf32>
    %28 = vector.broadcast %25 : vector<1x512xf32> to vector<128x512xf32>
    %29 = arith.addf %27, %28 : vector<128x512xf32>
    %30 = arith.truncf %29 : vector<128x512xf32> to vector<128x512xbf16>
    %c0_13 = arith.constant 0 : index
    %c0_14 = arith.constant 0 : index
    %31 = vector.load %arg3[%c0_13, %c0_14] : memref<512x256xbf16, #tpu.memory_space<vmem>>, vector<512x256xbf16>
    %cst_15 = arith.constant dense<0.000000e+00> : vector<128x256xf32>
    %32 = tpu.matmul %30, %31, %cst_15 {dimension_numbers = #tpu.dot_dimension_numbers<[1], [0], [0], [1], [0, 0, 1, 1], [], []>} : vector<128x512xbf16>, vector<512x256xbf16>, vector<128x256xf32> -> vector<128x256xf32>
    %c2 = arith.constant 2 : index
    %c0_16 = arith.constant 0 : index
    %33 = vector.load %arg6[%c2, %c0_16] : memref<8x512xf32, #tpu.memory_space<vmem>>, vector<1x256xf32>
    %c3 = arith.constant 3 : index
    %c0_17 = arith.constant 0 : index
    %34 = vector.load %arg6[%c3, %c0_17] : memref<8x512xf32, #tpu.memory_space<vmem>>, vector<1x256xf32>
    %cst_18 = arith.constant dense<0.000000e+00> : vector<256xf32>
    %35 = vector.multi_reduction <add>, %32, %cst_18 [0] : vector<128x256xf32> to vector<256xf32>
    %36 = vector.shape_cast %35 : vector<256xf32> to vector<1x256xf32>
    %37 = arith.mulf %32, %32 : vector<128x256xf32>
    %cst_19 = arith.constant dense<0.000000e+00> : vector<256xf32>
    %38 = vector.multi_reduction <add>, %37, %cst_19 [0] : vector<128x256xf32> to vector<256xf32>
    %39 = vector.shape_cast %38 : vector<256xf32> to vector<1x256xf32>
    %cst_20 = arith.constant 7.812500e-03 : f32
    %40 = vector.broadcast %cst_20 : f32 to vector<1x256xf32>
    %41 = arith.mulf %36, %40 : vector<1x256xf32>
    %cst_21 = arith.constant 7.812500e-03 : f32
    %42 = vector.broadcast %cst_21 : f32 to vector<1x256xf32>
    %43 = arith.mulf %39, %42 : vector<1x256xf32>
    %44 = arith.mulf %41, %41 : vector<1x256xf32>
    %45 = arith.subf %43, %44 : vector<1x256xf32>
    %cst_22 = arith.constant 0.000000e+00 : f32
    %46 = vector.broadcast %cst_22 : f32 to vector<1x256xf32>
    %47 = arith.maximumf %45, %46 : vector<1x256xf32>
    %cst_23 = arith.constant 9.99999974E-6 : f32
    %48 = vector.broadcast %cst_23 : f32 to vector<1x256xf32>
    %49 = arith.addf %47, %48 : vector<1x256xf32>
    %50 = math.rsqrt %49 : vector<1x256xf32>
    %51 = arith.mulf %33, %50 : vector<1x256xf32>
    %52 = arith.mulf %41, %51 : vector<1x256xf32>
    %53 = arith.subf %34, %52 : vector<1x256xf32>
    %54 = vector.broadcast %51 : vector<1x256xf32> to vector<128x256xf32>
    %55 = arith.mulf %32, %54 : vector<128x256xf32>
    %56 = vector.broadcast %53 : vector<1x256xf32> to vector<128x256xf32>
    %57 = arith.addf %55, %56 : vector<128x256xf32>
    %58 = arith.truncf %57 : vector<128x256xf32> to vector<128x256xbf16>
    %c0_24 = arith.constant 0 : index
    %c0_25 = arith.constant 0 : index
    %59 = vector.load %arg4[%c0_24, %c0_25] : memref<256x128xbf16, #tpu.memory_space<vmem>>, vector<256x128xbf16>
    %cst_26 = arith.constant dense<0.000000e+00> : vector<128x128xf32>
    %60 = tpu.matmul %58, %59, %cst_26 {dimension_numbers = #tpu.dot_dimension_numbers<[1], [0], [0], [1], [0, 0, 1, 1], [], []>} : vector<128x256xbf16>, vector<256x128xbf16>, vector<128x128xf32> -> vector<128x128xf32>
    %c4 = arith.constant 4 : index
    %c0_27 = arith.constant 0 : index
    %61 = vector.load %arg6[%c4, %c0_27] : memref<8x512xf32, #tpu.memory_space<vmem>>, vector<1x128xf32>
    %c5 = arith.constant 5 : index
    %c0_28 = arith.constant 0 : index
    %62 = vector.load %arg6[%c5, %c0_28] : memref<8x512xf32, #tpu.memory_space<vmem>>, vector<1x128xf32>
    %cst_29 = arith.constant dense<0.000000e+00> : vector<128xf32>
    %63 = vector.multi_reduction <add>, %60, %cst_29 [0] : vector<128x128xf32> to vector<128xf32>
    %64 = vector.shape_cast %63 : vector<128xf32> to vector<1x128xf32>
    %65 = arith.mulf %60, %60 : vector<128x128xf32>
    %cst_30 = arith.constant dense<0.000000e+00> : vector<128xf32>
    %66 = vector.multi_reduction <add>, %65, %cst_30 [0] : vector<128x128xf32> to vector<128xf32>
    %67 = vector.shape_cast %66 : vector<128xf32> to vector<1x128xf32>
    %cst_31 = arith.constant 7.812500e-03 : f32
    %68 = vector.broadcast %cst_31 : f32 to vector<1x128xf32>
    %69 = arith.mulf %64, %68 : vector<1x128xf32>
    %cst_32 = arith.constant 7.812500e-03 : f32
    %70 = vector.broadcast %cst_32 : f32 to vector<1x128xf32>
    %71 = arith.mulf %67, %70 : vector<1x128xf32>
    %72 = arith.mulf %69, %69 : vector<1x128xf32>
    %73 = arith.subf %71, %72 : vector<1x128xf32>
    %cst_33 = arith.constant 0.000000e+00 : f32
    %74 = vector.broadcast %cst_33 : f32 to vector<1x128xf32>
    %75 = arith.maximumf %73, %74 : vector<1x128xf32>
    %cst_34 = arith.constant 9.99999974E-6 : f32
    %76 = vector.broadcast %cst_34 : f32 to vector<1x128xf32>
    %77 = arith.addf %75, %76 : vector<1x128xf32>
    %78 = math.rsqrt %77 : vector<1x128xf32>
    %79 = arith.mulf %61, %78 : vector<1x128xf32>
    %80 = arith.mulf %69, %79 : vector<1x128xf32>
    %81 = arith.subf %62, %80 : vector<1x128xf32>
    %82 = vector.broadcast %79 : vector<1x128xf32> to vector<128x128xf32>
    %83 = arith.mulf %60, %82 : vector<128x128xf32>
    %84 = vector.broadcast %81 : vector<1x128xf32> to vector<128x128xf32>
    %85 = arith.addf %83, %84 : vector<128x128xf32>
    %86 = arith.truncf %85 : vector<128x128xf32> to vector<128x128xbf16>
    %c0_35 = arith.constant 0 : index
    %c0_36 = arith.constant 0 : index
    %87 = vector.load %arg5[%c0_35, %c0_36] : memref<128x128xbf16, #tpu.memory_space<vmem>>, vector<128x128xbf16>
    %cst_37 = arith.constant dense<0.000000e+00> : vector<128x128xf32>
    %88 = tpu.matmul %86, %87, %cst_37 {dimension_numbers = #tpu.dot_dimension_numbers<[1], [0], [0], [1], [0, 0, 1, 1], [], []>} : vector<128x128xbf16>, vector<128x128xbf16>, vector<128x128xf32> -> vector<128x128xf32>
    %c6 = arith.constant 6 : index
    %c0_38 = arith.constant 0 : index
    %89 = vector.load %arg6[%c6, %c0_38] : memref<8x512xf32, #tpu.memory_space<vmem>>, vector<1x128xf32>
    %90 = vector.broadcast %89 : vector<1x128xf32> to vector<128x128xf32>
    %91 = arith.addf %88, %90 : vector<128x128xf32>
    %cst_39 = arith.constant 0.000000e+00 : f32
    %92 = vector.broadcast %cst_39 : f32 to vector<128x128xf32>
    %93 = arith.maximumf %91, %92 : vector<128x128xf32>
    %c0_40 = arith.constant 0 : index
    %c0_41 = arith.constant 0 : index
    %c0_42 = arith.constant 0 : index
    %94 = vector.load %arg7[%c0_40, %c0_41, %c0_42] : memref<1x128x128xf32, #tpu.memory_space<vmem>>, vector<1x128x128xf32>
    %95 = vector.shape_cast %94 : vector<1x128x128xf32> to vector<128x128xf32>
    %96 = vector.shape_cast %93 : vector<128x128xf32> to vector<1x128x128xf32>
    tpu.vector_store %arg7[%c0_40, %c0_41, %c0_42], %96 {strides = array<i32>} : memref<1x128x128xf32, #tpu.memory_space<vmem>>, vector<1x128x128xf32>,
    return
  }
  func.func @transform_0(%arg0: i32) -> (i32, i32, i32) {
    %c0_i32 = arith.constant 0 : i32
    %c0_i32_0 = arith.constant 0 : i32
    %c0_i32_1 = arith.constant 0 : i32
    return %arg0, %c0_i32, %c0_i32_0 : i32, i32, i32
  }
  func.func @transform_1(%arg0: i32) -> (i32, i32) {
    %c0_i32 = arith.constant 0 : i32
    %c0_i32_0 = arith.constant 0 : i32
    %c0_i32_1 = arith.constant 0 : i32
    return %c0_i32, %c0_i32_0 : i32, i32
  }
  func.func @transform_2(%arg0: i32) -> (i32, i32) {
    %c0_i32 = arith.constant 0 : i32
    %c0_i32_0 = arith.constant 0 : i32
    %c0_i32_1 = arith.constant 0 : i32
    return %c0_i32, %c0_i32_0 : i32, i32
  }
  func.func @transform_3(%arg0: i32) -> (i32, i32) {
    %c0_i32 = arith.constant 0 : i32
    %c0_i32_0 = arith.constant 0 : i32
    %c0_i32_1 = arith.constant 0 : i32
    return %c0_i32, %c0_i32_0 : i32, i32
  }
  func.func @transform_4(%arg0: i32) -> (i32, i32) {
    %c0_i32 = arith.constant 0 : i32
    %c0_i32_0 = arith.constant 0 : i32
    %c0_i32_1 = arith.constant 0 : i32
    return %c0_i32, %c0_i32_0 : i32, i32
  }
  func.func @transform_5(%arg0: i32) -> (i32, i32) {
    %c0_i32 = arith.constant 0 : i32
    %c0_i32_0 = arith.constant 0 : i32
    %c0_i32_1 = arith.constant 0 : i32
    return %c0_i32, %c0_i32_0 : i32, i32
  }
  func.func @transform_6(%arg0: i32) -> (i32, i32, i32) {
    %c0_i32 = arith.constant 0 : i32
    %c0_i32_0 = arith.constant 0 : i32
    %c0_i32_1 = arith.constant 0 : i32
    return %arg0, %c0_i32, %c0_i32_0 : i32, i32, i32
  }
}

</mosaic_0001>

<llo_original>
// kernel: tpu_custom_call.1
$region0: #{tpu_custom_call.1}
  #allocation0 [shape = 'u32[]', space=smem, size = 0x4, offset = 0x4, fixed_abs, tag = 'smem constant byte address 0x4 - core index']
  #allocation1 [shape = 'u32[72,128]{1,0:T(1,128)}', space=vmem, size = 0x9000, scoped, tag = 'internal scratch']
  %s0 = inlined_call_operand.vmem [shape: f32[2,128,33], index: 0, kind: input, shape index: {}]
  %s1 = inlined_call_operand.vmem [shape: bf16[33,512], index: 1, kind: input, shape index: {}]
  %s2 = inlined_call_operand.hbm [shape: bf16[512,256], index: 2, kind: input, shape index: {}]
  %s3 = inlined_call_operand.vmem [shape: bf16[256,128], index: 3, kind: input, shape index: {}]
  %s4 = inlined_call_operand.vmem [shape: bf16[128,128], index: 4, kind: input, shape index: {}]
  %s5 = inlined_call_operand.vmem [shape: f32[8,512], index: 5, kind: input, shape index: {}]
  %s6 = inlined_call_operand.hbm [shape: f32[2,128,128], index: 6, kind: output, shape index: {}]
  %s7 = sld [smem:[#allocation0]]
  $region61: #{tpu_custom_call.1} parent=0
    _
  %s9 = ssub.s32 1, %s7
  %s10 = scalar_select 0, %s9, %s7
  $region1: #{tpu_custom_call.1} parent=0
    #allocation2 [shape = 'u8[262144]{0}', space=vmem, size = 0x40000, scoped, tag = 'input window, operand 2, single buffered']
    #allocation3 [shape = 's32[2]{0}', space=sflag, size = 0x8, scoped, tag = 'scoped memory for tpu_custom_call.1']
    #allocation4 [shape = 's32[2]{0}', space=sflag, size = 0x8, scoped, tag = 'scoped memory for tpu_custom_call.1']
    #allocation5 [shape = 'u8[131072]{0}', space=vmem, size = 0x20000, scoped, tag = 'output window, operand 0']
    %11 = vsyncpa [#allocation3], 0
    %12 = vsyncpa [#allocation4], 0
    %s13 = scalar_lea.sflag [#allocation4], 1
    %14 = vsyncpa %s13, 0
    loop: start=0, step=1, limit=4
    $region2: #{tpu_custom_call.1} parent=1 // loop_pre_header
      _
    $region3: #{tpu_custom_call.1} parent=1 // loop_header
      %s16 = sphi 0, %s20
      %p17 = scmp.ge.s32.totalorder %s16, 4
      %s26 = sphi 0, %s28
      %s29 = sphi 0, %s26
      %s30 = sphi 0, %s29
      %s46 = sphi 0, %s30
      %s50 = sphi 0, %s50
      %s52 = sphi 0, %s50
      %s53 = sphi 0, %s52
      %s67 = sphi 0, %s53
      %s71 = sphi 0, %s71
      %s73 = sphi 0, %s71
      %s74 = sphi 0, %s73
      %s88 = sphi 0, %s74
      %s92 = sphi 0, %s92
      %s94 = sphi 0, %s92
      %s95 = sphi 0, %s94
      %s109 = sphi 0, %s95
      %s113 = sphi 0, %s113
      %s115 = sphi 0, %s113
      %s116 = sphi 0, %s115
      %s130 = sphi 0, %s116
      %s134 = sphi 0, %s134
      %s136 = sphi 0, %s134
      %s137 = sphi 0, %s136
      %s151 = sphi 0, %s137
      %s157 = sphi 0, %s159
      %s160 = sphi 0, %s157
      %s161 = sphi 0, %s160
      %s177 = sphi 0, %s161
    $region4: #{tpu_custom_call.1} parent=1 // loop_header_branch
      %19 = sbr.rel (%p17) target = $region8
    $region5: #{tpu_custom_call.1} parent=1 // loop_body
      %s21 = ssub.s32 %s16, 1
      %s22 = ssub.s32 %s16, 2
      %s23 = sadd.s32 %s16, 1
      %s24 = ssub.s32 %s16, %s23
      %p25 = scmp.eq.s32.totalorder %s24, 0
      %s27 = sadd.s32 %s26, 1
      %s28 = scalar_select %p25, %s26, %s27
      %p31 = pneg %p25
      %p32 = scmp.eq.s32.totalorder %s16, 1
      %p33 = por %p31, %p32
      %p34 = scmp.ne.s32.totalorder %s26, %s29
      %p35 = scmp.eq.s32.totalorder %s16, 0
      %p36 = por %p34, %p35
      %p37 = scmp.ne.s32.totalorder %s26, %s29
      %p38 = scmp.eq.s32.totalorder %s21, 1
      %p39 = por %p37, %p38
      %p40 = scmp.ne.s32.totalorder %s29, %s30
      %p41 = scmp.eq.s32.totalorder %s21, 0
      %p42 = por %p40, %p41
      %p43 = scmp.ne.s32.totalorder %s29, %s30
      %p44 = scmp.eq.s32.totalorder %s22, 1
      %p45 = por %p43, %p44
      %p47 = scmp.ne.s32.totalorder %s30, %s46
      %p48 = scmp.eq.s32.totalorder %s22, 0
      %p49 = por %p47, %p48
      %s51 = sadd.s32 %s50, 1
      %p54 = scmp.eq.s32.totalorder %s16, 1
      %p55 = scmp.ne.s32.totalorder %s50, %s52
      %p56 = scmp.eq.s32.totalorder %s16, 0
      %p57 = por %p55, %p56
      %p58 = scmp.ne.s32.totalorder %s50, %s52
      %p59 = scmp.eq.s32.totalorder %s21, 1
      %p60 = por %p58, %p59
      %p61 = scmp.ne.s32.totalorder %s52, %s53
      %p62 = scmp.eq.s32.totalorder %s21, 0
      %p63 = por %p61, %p62
      %p64 = scmp.ne.s32.totalorder %s52, %s53
      %p65 = scmp.eq.s32.totalorder %s22, 1
      %p66 = por %p64, %p65
      %p68 = scmp.ne.s32.totalorder %s53, %s67
      %p69 = scmp.eq.s32.totalorder %s22, 0
      %p70 = por %p68, %p69
      %s72 = sadd.s32 %s71, 1
      %p75 = scmp.eq.s32.totalorder %s16, 1
      %p76 = scmp.ne.s32.totalorder %s71, %s73
      %p77 = scmp.eq.s32.totalorder %s16, 0
      %p78 = por %p76, %p77
      %p79 = scmp.ne.s32.totalorder %s71, %s73
      %p80 = scmp.eq.s32.totalorder %s21, 1
      %p81 = por %p79, %p80
      %p82 = scmp.ne.s32.totalorder %s73, %s74
      %p83 = scmp.eq.s32.totalorder %s21, 0
      %p84 = por %p82, %p83
      %p85 = scmp.ne.s32.totalorder %s73, %s74
      %p86 = scmp.eq.s32.totalorder %s22, 1
      %p87 = por %p85, %p86
      %p89 = scmp.ne.s32.totalorder %s74, %s88
      %p90 = scmp.eq.s32.totalorder %s22, 0
      %p91 = por %p89, %p90
      %s93 = sadd.s32 %s92, 1
      %p96 = scmp.eq.s32.totalorder %s16, 1
      %p97 = scmp.ne.s32.totalorder %s92, %s94
      %p98 = scmp.eq.s32.totalorder %s16, 0
      %p99 = por %p97, %p98
      %p100 = scmp.ne.s32.totalorder %s92, %s94
      %p101 = scmp.eq.s32.totalorder %s21, 1
      %p102 = por %p100, %p101
      %p103 = scmp.ne.s32.totalorder %s94, %s95
      %p104 = scmp.eq.s32.totalorder %s21, 0
      %p105 = por %p103, %p104
      %p106 = scmp.ne.s32.totalorder %s94, %s95
      %p107 = scmp.eq.s32.totalorder %s22, 1
      %p108 = por %p106, %p107
      %p110 = scmp.ne.s32.totalorder %s95, %s109
      %p111 = scmp.eq.s32.totalorder %s22, 0
      %p112 = por %p110, %p111
      %s114 = sadd.s32 %s113, 1
      %p117 = scmp.eq.s32.totalorder %s16, 1
      %p118 = scmp.ne.s32.totalorder %s113, %s115
      %p119 = scmp.eq.s32.totalorder %s16, 0
      %p120 = por %p118, %p119
      %p121 = scmp.ne.s32.totalorder %s113, %s115
      %p122 = scmp.eq.s32.totalorder %s21, 1
      %p123 = por %p121, %p122
      %p124 = scmp.ne.s32.totalorder %s115, %s116
      %p125 = scmp.eq.s32.totalorder %s21, 0
      %p126 = por %p124, %p125
      %p127 = scmp.ne.s32.totalorder %s115, %s116
      %p128 = scmp.eq.s32.totalorder %s22, 1
      %p129 = por %p127, %p128
      %p131 = scmp.ne.s32.totalorder %s116, %s130
      %p132 = scmp.eq.s32.totalorder %s22, 0
      %p133 = por %p131, %p132
      %s135 = sadd.s32 %s134, 1
      %p138 = scmp.eq.s32.totalorder %s16, 1
      %p139 = scmp.ne.s32.totalorder %s134, %s136
      %p140 = scmp.eq.s32.totalorder %s16, 0
      %p141 = por %p139, %p140
      %p142 = scmp.ne.s32.totalorder %s134, %s136
      %p143 = scmp.eq.s32.totalorder %s21, 1
      %p144 = por %p142, %p143
      %p145 = scmp.ne.s32.totalorder %s136, %s137
      %p146 = scmp.eq.s32.totalorder %s21, 0
      %p147 = por %p145, %p146
      %p148 = scmp.ne.s32.totalorder %s136, %s137
      %p149 = scmp.eq.s32.totalorder %s22, 1
      %p150 = por %p148, %p149
      %p152 = scmp.ne.s32.totalorder %s137, %s151
      %p153 = scmp.eq.s32.totalorder %s22, 0
      %p154 = por %p152, %p153
      %s155 = ssub.s32 %s16, %s23
      %p156 = scmp.eq.s32.totalorder %s155, 0
      %s158 = sadd.s32 %s157, 1
      %s159 = scalar_select %p156, %s157, %s158
      %p162 = pneg %p156
      %p163 = scmp.eq.s32.totalorder %s16, 1
      %p164 = por %p162, %p163
      %p165 = scmp.ne.s32.totalorder %s157, %s160
      %p166 = scmp.eq.s32.totalorder %s16, 0
      %p167 = por %p165, %p166
      %p168 = scmp.ne.s32.totalorder %s157, %s160
      %p169 = scmp.eq.s32.totalorder %s21, 1
      %p170 = por %p168, %p169
      %p171 = scmp.ne.s32.totalorder %s160, %s161
      %p172 = scmp.eq.s32.totalorder %s21, 0
      %p173 = por %p171, %p172
      %p174 = scmp.ne.s32.totalorder %s160, %s161
      %p175 = scmp.eq.s32.totalorder %s22, 1
      %p176 = por %p174, %p175
      %p178 = scmp.ne.s32.totalorder %s161, %s177
      %p179 = scmp.eq.s32.totalorder %s22, 0
      %p180 = por %p178, %p179
      %p181 = scmp.le.s32.totalorder 1, %s16
      %p182 = scmp.lt.s32.totalorder %s16, 3
      %p183 = pnand %p181, %p182
      %p184 = pneg %p183
      // Predicated region
      $region9: #{tpu_custom_call.1} parent=5 // pred_check
        _
      $region10: #{tpu_custom_call.1} parent=5 // pred_check_branch
        %186 = sbr.rel (%p183) target = $region12
      $region11: #{tpu_custom_call.1} parent=5 // pred_region
        %s187 = ssub.s32 %s16, 1
        // Predicated region
        $region13: #{tpu_custom_call.1} parent=11 // pred_check
          %p188 = pneg %p63
        $region14: #{tpu_custom_call.1} parent=11 // pred_check_branch
          %190 = sbr.rel (%p188) target = $region16
        $region15: #{tpu_custom_call.1} parent=11 // pred_region
          _
        $region16: #{tpu_custom_call.1} parent=11 // pred_fallthru
          _
        // Predicated region
        $region17: #{tpu_custom_call.1} parent=11 // pred_check
          %p191 = pneg %p84
        $region18: #{tpu_custom_call.1} parent=11 // pred_check_branch
          %193 = sbr.rel (%p191) target = $region20
        $region19: #{tpu_custom_call.1} parent=11 // pred_region
          %195 = vsyncadd [#allocation3], 0
          %s196 = sshll.u32 %s2, 4
          %s197 = int_to_ptr.hbm [resolvable:$true] %s196
          %s198 = sshll.u32 [#allocation2], 4
          %s199 = int_to_ptr.vmem [resolvable:$true] %s198
          %204 = dma.hbm_to_vmem [thread:$0]  %s197, 8192, %s199, [#allocation3], 128, 128, 8
        $region20: #{tpu_custom_call.1} parent=11 // pred_fallthru
          _
        // Predicated region
        $region21: #{tpu_custom_call.1} parent=11 // pred_check
          %p205 = pneg %p105
        $region22: #{tpu_custom_call.1} parent=11 // pred_check_branch
          %207 = sbr.rel (%p205) target = $region24
        $region23: #{tpu_custom_call.1} parent=11 // pred_region
          _
        $region24: #{tpu_custom_call.1} parent=11 // pred_fallthru
          _
        // Predicated region
        $region25: #{tpu_custom_call.1} parent=11 // pred_check
          %p208 = pneg %p126
        $region26: #{tpu_custom_call.1} parent=11 // pred_check_branch
          %210 = sbr.rel (%p208) target = $region28
        $region27: #{tpu_custom_call.1} parent=11 // pred_region
          _
        $region28: #{tpu_custom_call.1} parent=11 // pred_fallthru
          _
        // Predicated region
        $region29: #{tpu_custom_call.1} parent=11 // pred_check
          %p211 = pneg %p147
        $region30: #{tpu_custom_call.1} parent=11 // pred_check_branch
          %213 = sbr.rel (%p211) target = $region32
        $region31: #{tpu_custom_call.1} parent=11 // pred_region
          _
        $region32: #{tpu_custom_call.1} parent=11 // pred_fallthru
          _
      $region12: #{tpu_custom_call.1} parent=5 // pred_fallthru
        _
      %p214 = scmp.lt.s32.totalorder %s16, 2
      // Predicated region
      $region33: #{tpu_custom_call.1} parent=5 // pred_check
        %p215 = pneg %p214
      $region34: #{tpu_custom_call.1} parent=5 // pred_check_branch
        %217 = sbr.rel (%p215) target = $region36
      $region35: #{tpu_custom_call.1} parent=5 // pred_region
        // Predicated region
        $region37: #{tpu_custom_call.1} parent=35 // pred_check
          %p218 = pneg %p36
        $region38: #{tpu_custom_call.1} parent=35 // pred_check_branch
          %220 = sbr.rel (%p218) target = $region40
        $region39: #{tpu_custom_call.1} parent=35 // pred_region
          %p221 = scmp.lt.s32.totalorder %s16, 1
          %s222 = scalar_select %p221, %s16, 1
          %s223 = smul.addr %s222, 16
          %s224 = smul.addr %s223, 8
          %s225 = scalar_lea.vmem %s0, %s224
        $region40: #{tpu_custom_call.1} parent=35 // pred_fallthru
          _
      $region36: #{tpu_custom_call.1} parent=5 // pred_fallthru
        _
      %p226 = scmp.le.s32.totalorder 1, %s16
      %p227 = scmp.lt.s32.totalorder %s16, 3
      %p228 = pnand %p226, %p227
      %p229 = pneg %p228
      // Predicated region
      $region41: #{tpu_custom_call.1} parent=5 // pred_check
        _
      $region42: #{tpu_custom_call.1} parent=5 // pred_check_branch
        %231 = sbr.rel (%p228) target = $region44
      $region43: #{tpu_custom_call.1} parent=5 // pred_region
        %s232 = ssub.s32 %s16, 1
        // Predicated region
        $region45: #{tpu_custom_call.1} parent=43 // pred_check
          %p233 = pneg %p84
        $region46: #{tpu_custom_call.1} parent=43 // pred_check_branch
          %235 = sbr.rel (%p233) target = $region48
        $region47: #{tpu_custom_call.1} parent=43 // pred_region
          %237 = dma.done [#allocation3], 8192
        $region48: #{tpu_custom_call.1} parent=43 // pred_fallthru
          _
        %p238 = scmp.lt.s32.totalorder %s21, 1
        %s239 = scalar_select %p238, %s21, 1
        %s240 = smul.addr %s239, 16
        %s241 = smul.addr %s240, 8
        %s242 = scalar_lea.vmem %s0, %s241
        %p243 = pneg %p42
        %p244 = pneg %p39
        %p245 = pneg %p63
        %p246 = pneg %p60
        %p247 = pneg %p84
        %p248 = pneg %p81
        %p249 = pneg %p105
        %p250 = pneg %p102
        %p251 = pneg %p126
        %p252 = pneg %p123
        %p253 = pneg %p147
        %p254 = pneg %p144
        %p255 = pneg %p173
        %p256 = pneg %p170
        %s257 = sand.u32 %s160, 1
        %s258 = scalar_lea.sflag [#allocation4], %s257
        %s259 = sand.u32 %s160, 1
        %s260 = smul.addr %s259, 128
        %s261 = scalar_lea.vmem [#allocation5], %s260
        %p262 = scmp.lt.s32.totalorder %s21, 1
        %s263 = scalar_select %p262, %s21, 1
        %s264 = smul.addr %s263, 16
        %s265 = smul.addr %s264, 8
        %s266 = scalar_lea.vmem %s0, %s265
        %v268 = vld [vmem:[%s266] sm:$0xff]
        %v269 = vld [vmem:[%s266 + $0x8] sm:$0xff]
        %v270 = vld [vmem:[%s266 + $0x10] sm:$0xff]
        %v271 = vld [vmem:[%s266 + $0x18] sm:$0xff]
        %v272 = vld [vmem:[%s266 + $0x20] sm:$0xff]
        %v273 = vld [vmem:[%s266 + $0x28] sm:$0xff]
        %v274 = vld [vmem:[%s266 + $0x30] sm:$0xff]
        %v275 = vld [vmem:[%s266 + $0x38] sm:$0xff]
        %v276 = vld [vmem:[%s266 + $0x40] sm:$0xff]
        %v277 = vld [vmem:[%s266 + $0x48] sm:$0xff]
        %v278 = vld [vmem:[%s266 + $0x50] sm:$0xff]
        %v279 = vld [vmem:[%s266 + $0x58] sm:$0xff]
        %v280 = vld [vmem:[%s266 + $0x60] sm:$0xff]
        %v281 = vld [vmem:[%s266 + $0x68] sm:$0xff]
        %v282 = vld [vmem:[%s266 + $0x70] sm:$0xff]
        %v283 = vld [vmem:[%s266 + $0x78] sm:$0xff]
        %v284 = vpack.c.bf16 %v269, %v268
        %v285 = vpack.c.bf16 %v271, %v270
        %v286 = vpack.c.bf16 %v273, %v272
        %v287 = vpack.c.bf16 %v275, %v274
        %v288 = vpack.c.bf16 %v277, %v276
        %v289 = vpack.c.bf16 %v279, %v278
        %v290 = vpack.c.bf16 %v281, %v280
        %v291 = vpack.c.bf16 %v283, %v282
        %v292 = vld [vmem:[%s1] sm:$0xff]
        %v293 = vld [vmem:[%s1 + $0x8] sm:$0xff]
        %v294 = vld [vmem:[%s1 + $0x10] sm:$0xff]
        %v295 = vld [vmem:[%s1 + $0x18] sm:$0xff]
        %v296 = vld [vmem:[%s1 + $0x20] sm:$0xff]
        %v297 = vld [vmem:[%s1 + $0x28] sm:$0xff]
        %v298 = vld [vmem:[%s1 + $0x30] sm:$0xff]
        %v299 = vld [vmem:[%s1 + $0x38] sm:$0xff]
        %v300 = vld [vmem:[%s1 + $0x40] sm:$0x11]
        %v301 = vld [vmem:[%s1 + $0x48] sm:$0x11]
        %v312 = vunpack.c.l.b16 %v292
        %v313 = vunpack.c.h.b16 %v292
        %v314 = vunpack.c.l.b16 %v293
        %v315 = vunpack.c.h.b16 %v293
        %v316 = vunpack.c.l.b16 %v294
        %v317 = vunpack.c.h.b16 %v294
        %v318 = vunpack.c.l.b16 %v295
        %v319 = vunpack.c.h.b16 %v295
        %v320 = vunpack.c.l.b16 %v296
        %v321 = vunpack.c.h.b16 %v296
        %v322 = vunpack.c.l.b16 %v297
        %v323 = vunpack.c.h.b16 %v297
        %v324 = vunpack.c.l.b16 %v298
        %v325 = vunpack.c.h.b16 %v298
        %v326 = vunpack.c.l.b16 %v299
        %v327 = vunpack.c.h.b16 %v299
        %v328 = vunpack.c.l.b16 %v300
        %v329 = vunpack.c.h.b16 %v300
        %v330 = vunpack.c.l.b16 %v301
        %v331 = vunpack.c.h.b16 %v301
        %v332 = vpack.c.b16 %v316, %v312
        %v333 = vpack.c.b16 %v317, %v313
        %v334 = vpack.c.b16 %v318, %v314
        %v335 = vpack.c.b16 %v319, %v315
        %v336 = vpack.c.b16 %v324, %v320
        %v337 = vpack.c.b16 %v325, %v321
        %v338 = vpack.c.b16 %v326, %v322
        %v339 = vpack.c.b16 %v327, %v323
        %v340 = vpack.c.b16 %v328, %v328
        %v341 = vpack.c.b16 %v329, %v329
        %v342 = vpack.c.b16 %v330, %v330
        %v343 = vpack.c.b16 %v331, %v331
        %vm352 = vcmask 269312
        %v354 = vsel %vm352, %v284, 0
        %v357 = vsel %vm352, %v285, 0
        %v360 = vsel %vm352, %v286, 0
        %v363 = vsel %vm352, %v287, 0
        %v366 = vsel %vm352, %v288, 0
        %v369 = vsel %vm352, %v289, 0
        %v372 = vsel %vm352, %v290, 0
        %v375 = vsel %vm352, %v291, 0
        %vm377 = vcmask 1040384
        %v378 = vsel 0, 4294967295, 65535
        %v379 = vsel %vm377, %v378, 0
        %v381 = vand.u32 %v340, %v379
        %v384 = vand.u32 %v341, %v379
        %v387 = vand.u32 %v342, %v379
        %v390 = vand.u32 %v343, %v379
        %392 = vmatpush.bf16.msra.mxu0 0
        %393 = vmatpush.bf16.msra.mxu0 0
        %394 = vmatpush.bf16.msra.mxu0 0
        %395 = vmatpush.bf16.msra.mxu0 0
        %396 = vmatpush.bf16.msra.mxu0 0
        %397 = vmatpush.bf16.msra.mxu0 %v381
        %398 = vmatpush.bf16.msra.mxu0 %v336
        %399 = vmatpush.bf16.msra.mxu0 %v332
        %400 = vmatmul.bf16.gmra.mxu0 %v354
        %v401 = vpop.f32.mrf.mxu0
        %v402 = vadd.f32 0.0, %v401
        %v403 = vpop.f32.mrf.mxu0
        %v404 = vadd.f32 0.0, %v403
        %405 = vmatmul.bf16.gmra.mxu0 %v357
        %v406 = vpop.f32.mrf.mxu0
        %v407 = vadd.f32 0.0, %v406
        %v408 = vpop.f32.mrf.mxu0
        %v409 = vadd.f32 0.0, %v408
        %410 = vmatmul.bf16.gmra.mxu0 %v360
        %v411 = vpop.f32.mrf.mxu0
        %v412 = vadd.f32 0.0, %v411
        %v413 = vpop.f32.mrf.mxu0
        %v414 = vadd.f32 0.0, %v413
        %415 = vmatmul.bf16.gmra.mxu0 %v363
        %v416 = vpop.f32.mrf.mxu0
        %v417 = vadd.f32 0.0, %v416
        %v418 = vpop.f32.mrf.mxu0
        %v419 = vadd.f32 0.0, %v418
        %420 = vmatmul.bf16.gmra.mxu0 %v366
        %v421 = vpop.f32.mrf.mxu0
        %v422 = vadd.f32 0.0, %v421
        %v423 = vpop.f32.mrf.mxu0
        %v424 = vadd.f32 0.0, %v423
        %425 = vmatmul.bf16.gmra.mxu0 %v369
        %v426 = vpop.f32.mrf.mxu0
        %v427 = vadd.f32 0.0, %v426
        %v428 = vpop.f32.mrf.mxu0
        %v429 = vadd.f32 0.0, %v428
        %430 = vmatmul.bf16.gmra.mxu0 %v372
        %v431 = vpop.f32.mrf.mxu0
        %v432 = vadd.f32 0.0, %v431
        %v433 = vpop.f32.mrf.mxu0
        %v434 = vadd.f32 0.0, %v433
        %435 = vmatmul.bf16.gmra.mxu0 %v375
        %v436 = vpop.f32.mrf.mxu0
        %v437 = vadd.f32 0.0, %v436
        %v438 = vpop.f32.mrf.mxu0
        %v439 = vadd.f32 0.0, %v438
        %440 = vdwg.mxu0
        %441 = vmatpush.bf16.msra.mxu0 0
        %442 = vmatpush.bf16.msra.mxu0 0
        %443 = vmatpush.bf16.msra.mxu0 0
        %444 = vmatpush.bf16.msra.mxu0 0
        %445 = vmatpush.bf16.msra.mxu0 0
        %446 = vmatpush.bf16.msra.mxu0 %v384
        %447 = vmatpush.bf16.msra.mxu0 %v337
        %448 = vmatpush.bf16.msra.mxu0 %v333
        %449 = vmatmul.bf16.gmra.mxu0 %v354
        %v450 = vpop.f32.mrf.mxu0
        %v451 = vadd.f32 0.0, %v450
        %v452 = vpop.f32.mrf.mxu0
        %v453 = vadd.f32 0.0, %v452
        %454 = vmatmul.bf16.gmra.mxu0 %v357
        %v455 = vpop.f32.mrf.mxu0
        %v456 = vadd.f32 0.0, %v455
        %v457 = vpop.f32.mrf.mxu0
        %v458 = vadd.f32 0.0, %v457
        %459 = vmatmul.bf16.gmra.mxu0 %v360
        %v460 = vpop.f32.mrf.mxu0
        %v461 = vadd.f32 0.0, %v460
        %v462 = vpop.f32.mrf.mxu0
        %v463 = vadd.f32 0.0, %v462
        %464 = vmatmul.bf16.gmra.mxu0 %v363
        %v465 = vpop.f32.mrf.mxu0
        %v466 = vadd.f32 0.0, %v465
        %v467 = vpop.f32.mrf.mxu0
        %v468 = vadd.f32 0.0, %v467
        %469 = vmatmul.bf16.gmra.mxu0 %v366
        %v470 = vpop.f32.mrf.mxu0
        %v471 = vadd.f32 0.0, %v470
        %v472 = vpop.f32.mrf.mxu0
        %v473 = vadd.f32 0.0, %v472
        %474 = vmatmul.bf16.gmra.mxu0 %v369
        %v475 = vpop.f32.mrf.mxu0
        %v476 = vadd.f32 0.0, %v475
        %v477 = vpop.f32.mrf.mxu0
        %v478 = vadd.f32 0.0, %v477
        %479 = vmatmul.bf16.gmra.mxu0 %v372
        %v480 = vpop.f32.mrf.mxu0
        %v481 = vadd.f32 0.0, %v480
        %v482 = vpop.f32.mrf.mxu0
        %v483 = vadd.f32 0.0, %v482
        %484 = vmatmul.bf16.gmra.mxu0 %v375
        %v485 = vpop.f32.mrf.mxu0
        %v486 = vadd.f32 0.0, %v485
        %v487 = vpop.f32.mrf.mxu0
        %v488 = vadd.f32 0.0, %v487
        %489 = vdwg.mxu0
        %490 = vmatpush.bf16.msra.mxu0 0
        %491 = vmatpush.bf16.msra.mxu0 0
        %492 = vmatpush.bf16.msra.mxu0 0
        %493 = vmatpush.bf16.msra.mxu0 0
        %494 = vmatpush.bf16.msra.mxu0 0
        %495 = vmatpush.bf16.msra.mxu0 %v387
        %496 = vmatpush.bf16.msra.mxu0 %v338
        %497 = vmatpush.bf16.msra.mxu0 %v334
        %498 = vmatmul.bf16.gmra.mxu0 %v354
        %v499 = vpop.f32.mrf.mxu0
        %v500 = vadd.f32 0.0, %v499
        %v501 = vpop.f32.mrf.mxu0
        %v502 = vadd.f32 0.0, %v501
        %503 = vmatmul.bf16.gmra.mxu0 %v357
        %v504 = vpop.f32.mrf.mxu0
        %v505 = vadd.f32 0.0, %v504
        %v506 = vpop.f32.mrf.mxu0
        %v507 = vadd.f32 0.0, %v506
        %508 = vmatmul.bf16.gmra.mxu0 %v360
        %v509 = vpop.f32.mrf.mxu0
        %v510 = vadd.f32 0.0, %v509
        %v511 = vpop.f32.mrf.mxu0
        %v512 = vadd.f32 0.0, %v511
        %513 = vmatmul.bf16.gmra.mxu0 %v363
        %v514 = vpop.f32.mrf.mxu0
        %v515 = vadd.f32 0.0, %v514
        %v516 = vpop.f32.mrf.mxu0
        %v517 = vadd.f32 0.0, %v516
        %518 = vmatmul.bf16.gmra.mxu0 %v366
        %v519 = vpop.f32.mrf.mxu0
        %v520 = vadd.f32 0.0, %v519
        %v521 = vpop.f32.mrf.mxu0
        %v522 = vadd.f32 0.0, %v521
        %523 = vmatmul.bf16.gmra.mxu0 %v369
        %v524 = vpop.f32.mrf.mxu0
        %v525 = vadd.f32 0.0, %v524
        %v526 = vpop.f32.mrf.mxu0
        %v527 = vadd.f32 0.0, %v526
        %528 = vmatmul.bf16.gmra.mxu0 %v372
        %v529 = vpop.f32.mrf.mxu0
        %v530 = vadd.f32 0.0, %v529
        %v531 = vpop.f32.mrf.mxu0
        %v532 = vadd.f32 0.0, %v531
        %533 = vmatmul.bf16.gmra.mxu0 %v375
        %v534 = vpop.f32.mrf.mxu0
        %v535 = vadd.f32 0.0, %v534
        %v536 = vpop.f32.mrf.mxu0
        %v537 = vadd.f32 0.0, %v536
        %538 = vdwg.mxu0
        %539 = vmatpush.bf16.msra.mxu0 0
        %540 = vmatpush.bf16.msra.mxu0 0
        %541 = vmatpush.bf16.msra.mxu0 0
        %542 = vmatpush.bf16.msra.mxu0 0
        %543 = vmatpush.bf16.msra.mxu0 0
        %544 = vmatpush.bf16.msra.mxu0 %v390
        %545 = vmatpush.bf16.msra.mxu0 %v339
        %546 = vmatpush.bf16.msra.mxu0 %v335
        %547 = vmatmul.bf16.gmra.mxu0 %v354
        %v548 = vpop.f32.mrf.mxu0
        %v549 = vadd.f32 0.0, %v548
        %v550 = vpop.f32.mrf.mxu0
        %v551 = vadd.f32 0.0, %v550
        %552 = vmatmul.bf16.gmra.mxu0 %v357
        %v553 = vpop.f32.mrf.mxu0
        %v554 = vadd.f32 0.0, %v553
        %v555 = vpop.f32.mrf.mxu0
        %v556 = vadd.f32 0.0, %v555
        %557 = vmatmul.bf16.gmra.mxu0 %v360
        %v558 = vpop.f32.mrf.mxu0
        %v559 = vadd.f32 0.0, %v558
        %v560 = vpop.f32.mrf.mxu0
        %v561 = vadd.f32 0.0, %v560
        %562 = vmatmul.bf16.gmra.mxu0 %v363
        %v563 = vpop.f32.mrf.mxu0
        %v564 = vadd.f32 0.0, %v563
        %v565 = vpop.f32.mrf.mxu0
        %v566 = vadd.f32 0.0, %v565
        %567 = vmatmul.bf16.gmra.mxu0 %v366
        %v568 = vpop.f32.mrf.mxu0
        %v569 = vadd.f32 0.0, %v568
        %v570 = vpop.f32.mrf.mxu0
        %v571 = vadd.f32 0.0, %v570
        %572 = vmatmul.bf16.gmra.mxu0 %v369
        %v573 = vpop.f32.mrf.mxu0
        %v574 = vadd.f32 0.0, %v573
        %v575 = vpop.f32.mrf.mxu0
        %v576 = vadd.f32 0.0, %v575
        %577 = vmatmul.bf16.gmra.mxu0 %v372
        %v578 = vpop.f32.mrf.mxu0
        %v579 = vadd.f32 0.0, %v578
        %v580 = vpop.f32.mrf.mxu0
        %v581 = vadd.f32 0.0, %v580
        %582 = vmatmul.bf16.gmra.mxu0 %v375
        %v583 = vpop.f32.mrf.mxu0
        %v584 = vadd.f32 0.0, %v583
        %v585 = vpop.f32.mrf.mxu0
        %v586 = vadd.f32 0.0, %v585
        %587 = vdwg.mxu0
        %v588 = vld [vmem:[%s5] ss:$8 sm:$0xf]
        %s589 = scalar_lea.vmem %s5, 1
        %v590 = vld [vmem:[%s589] ss:$8 sm:$0xf]
        %v591 = vadd.f32 %v402, %v404
        %v592 = vadd.f32 %v591, %v407
        %v593 = vadd.f32 %v592, %v409
        %v594 = vadd.f32 %v593, %v412
        %v595 = vadd.f32 %v594, %v414
        %v596 = vadd.f32 %v595, %v417
        %v597 = vadd.f32 %v596, %v419
        %v598 = vadd.f32 %v597, %v422
        %v599 = vadd.f32 %v598, %v424
        %v600 = vadd.f32 %v599, %v427
        %v601 = vadd.f32 %v600, %v429
        %v602 = vadd.f32 %v601, %v432
        %v603 = vadd.f32 %v602, %v434
        %v604 = vadd.f32 %v603, %v437
        %v605 = vadd.f32 %v604, %v439
        %v606 = vrot.slane %v605, 4
        %v607 = vadd.f32 %v605, %v606
        %v608 = vrot.slane %v607, 2
        %v609 = vadd.f32 %v607, %v608
        %v610 = vrot.slane %v609, 1
        %v611 = vadd.f32 %v609, %v610
        %v612 = vadd.f32 %v451, %v453
        %v613 = vadd.f32 %v612, %v456
        %v614 = vadd.f32 %v613, %v458
        %v615 = vadd.f32 %v614, %v461
        %v616 = vadd.f32 %v615, %v463
        %v617 = vadd.f32 %v616, %v466
        %v618 = vadd.f32 %v617, %v468
        %v619 = vadd.f32 %v618, %v471
        %v620 = vadd.f32 %v619, %v473
        %v621 = vadd.f32 %v620, %v476
        %v622 = vadd.f32 %v621, %v478
        %v623 = vadd.f32 %v622, %v481
        %v624 = vadd.f32 %v623, %v483
        %v625 = vadd.f32 %v624, %v486
        %v626 = vadd.f32 %v625, %v488
        %v627 = vrot.slane %v626, 4
        %v628 = vadd.f32 %v626, %v627
        %v629 = vrot.slane %v628, 2
        %v630 = vadd.f32 %v628, %v629
        %v631 = vrot.slane %v630, 1
        %v632 = vadd.f32 %v630, %v631
        %v633 = vadd.f32 %v500, %v502
        %v634 = vadd.f32 %v633, %v505
        %v635 = vadd.f32 %v634, %v507
        %v636 = vadd.f32 %v635, %v510
        %v637 = vadd.f32 %v636, %v512
        %v638 = vadd.f32 %v637, %v515
        %v639 = vadd.f32 %v638, %v517
        %v640 = vadd.f32 %v639, %v520
        %v641 = vadd.f32 %v640, %v522
        %v642 = vadd.f32 %v641, %v525
        %v643 = vadd.f32 %v642, %v527
        %v644 = vadd.f32 %v643, %v530
        %v645 = vadd.f32 %v644, %v532
        %v646 = vadd.f32 %v645, %v535
        %v647 = vadd.f32 %v646, %v537
        %v648 = vrot.slane %v647, 4
        %v649 = vadd.f32 %v647, %v648
        %v650 = vrot.slane %v649, 2
        %v651 = vadd.f32 %v649, %v650
        %v652 = vrot.slane %v651, 1
        %v653 = vadd.f32 %v651, %v652
        %v654 = vadd.f32 %v549, %v551
        %v655 = vadd.f32 %v654, %v554
        %v656 = vadd.f32 %v655, %v556
        %v657 = vadd.f32 %v656, %v559
        %v658 = vadd.f32 %v657, %v561
        %v659 = vadd.f32 %v658, %v564
        %v660 = vadd.f32 %v659, %v566
        %v661 = vadd.f32 %v660, %v569
        %v662 = vadd.f32 %v661, %v571
        %v663 = vadd.f32 %v662, %v574
        %v664 = vadd.f32 %v663, %v576
        %v665 = vadd.f32 %v664, %v579
        %v666 = vadd.f32 %v665, %v581
        %v667 = vadd.f32 %v666, %v584
        %v668 = vadd.f32 %v667, %v586
        %v669 = vrot.slane %v668, 4
        %v670 = vadd.f32 %v668, %v669
        %v671 = vrot.slane %v670, 2
        %v672 = vadd.f32 %v670, %v671
        %v673 = vrot.slane %v672, 1
        %v674 = vadd.f32 %v672, %v673
        %v675 = vmul.f32 %v402, %v402
        %v676 = vmul.f32 %v451, %v451
        %v677 = vmul.f32 %v500, %v500
        %v678 = vmul.f32 %v549, %v549
        %v679 = vmul.f32 %v404, %v404
        %v680 = vmul.f32 %v453, %v453
        %v681 = vmul.f32 %v502, %v502
        %v682 = vmul.f32 %v551, %v551
        %v683 = vmul.f32 %v407, %v407
        %v684 = vmul.f32 %v456, %v456
        %v685 = vmul.f32 %v505, %v505
        %v686 = vmul.f32 %v554, %v554
        %v687 = vmul.f32 %v409, %v409
        %v688 = vmul.f32 %v458, %v458
        %v689 = vmul.f32 %v507, %v507
        %v690 = vmul.f32 %v556, %v556
        %v691 = vmul.f32 %v412, %v412
        %v692 = vmul.f32 %v461, %v461
        %v693 = vmul.f32 %v510, %v510
        %v694 = vmul.f32 %v559, %v559
        %v695 = vmul.f32 %v414, %v414
        %v696 = vmul.f32 %v463, %v463
        %v697 = vmul.f32 %v512, %v512
        %v698 = vmul.f32 %v561, %v561
        %v699 = vmul.f32 %v417, %v417
        %v700 = vmul.f32 %v466, %v466
        %v701 = vmul.f32 %v515, %v515
        %v702 = vmul.f32 %v564, %v564
        %v703 = vmul.f32 %v419, %v419
        %v704 = vmul.f32 %v468, %v468
        %v705 = vmul.f32 %v517, %v517
        %v706 = vmul.f32 %v566, %v566
        %v707 = vmul.f32 %v422, %v422
        %v708 = vmul.f32 %v471, %v471
        %v709 = vmul.f32 %v520, %v520
        %v710 = vmul.f32 %v569, %v569
        %v711 = vmul.f32 %v424, %v424
        %v712 = vmul.f32 %v473, %v473
        %v713 = vmul.f32 %v522, %v522
        %v714 = vmul.f32 %v571, %v571
        %v715 = vmul.f32 %v427, %v427
        %v716 = vmul.f32 %v476, %v476
        %v717 = vmul.f32 %v525, %v525
        %v718 = vmul.f32 %v574, %v574
        %v719 = vmul.f32 %v429, %v429
        %v720 = vmul.f32 %v478, %v478
        %v721 = vmul.f32 %v527, %v527
        %v722 = vmul.f32 %v576, %v576
        %v723 = vmul.f32 %v432, %v432
        %v724 = vmul.f32 %v481, %v481
        %v725 = vmul.f32 %v530, %v530
        %v726 = vmul.f32 %v579, %v579
        %v727 = vmul.f32 %v434, %v434
        %v728 = vmul.f32 %v483, %v483
        %v729 = vmul.f32 %v532, %v532
        %v730 = vmul.f32 %v581, %v581
        %v731 = vmul.f32 %v437, %v437
        %v732 = vmul.f32 %v486, %v486
        %v733 = vmul.f32 %v535, %v535
        %v734 = vmul.f32 %v584, %v584
        %v735 = vmul.f32 %v439, %v439
        %v736 = vmul.f32 %v488, %v488
        %v737 = vmul.f32 %v537, %v537
        %v738 = vmul.f32 %v586, %v586
        %v739 = vadd.f32 %v675, %v679
        %v740 = vadd.f32 %v739, %v683
        %v741 = vadd.f32 %v740, %v687
        %v742 = vadd.f32 %v741, %v691
        %v743 = vadd.f32 %v742, %v695
        %v744 = vadd.f32 %v743, %v699
        %v745 = vadd.f32 %v744, %v703
        %v746 = vadd.f32 %v745, %v707
        %v747 = vadd.f32 %v746, %v711
        %v748 = vadd.f32 %v747, %v715
        %v749 = vadd.f32 %v748, %v719
        %v750 = vadd.f32 %v749, %v723
        %v751 = vadd.f32 %v750, %v727
        %v752 = vadd.f32 %v751, %v731
        %v753 = vadd.f32 %v752, %v735
        %v754 = vrot.slane %v753, 4
        %v755 = vadd.f32 %v753, %v754
        %v756 = vrot.slane %v755, 2
        %v757 = vadd.f32 %v755, %v756
        %v758 = vrot.slane %v757, 1
        %v759 = vadd.f32 %v757, %v758
        %v760 = vadd.f32 %v676, %v680
        %v761 = vadd.f32 %v760, %v684
        %v762 = vadd.f32 %v761, %v688
        %v763 = vadd.f32 %v762, %v692
        %v764 = vadd.f32 %v763, %v696
        %v765 = vadd.f32 %v764, %v700
        %v766 = vadd.f32 %v765, %v704
        %v767 = vadd.f32 %v766, %v708
        %v768 = vadd.f32 %v767, %v712
        %v769 = vadd.f32 %v768, %v716
        %v770 = vadd.f32 %v769, %v720
        %v771 = vadd.f32 %v770, %v724
        %v772 = vadd.f32 %v771, %v728
        %v773 = vadd.f32 %v772, %v732
        %v774 = vadd.f32 %v773, %v736
        %v775 = vrot.slane %v774, 4
        %v776 = vadd.f32 %v774, %v775
        %v777 = vrot.slane %v776, 2
        %v778 = vadd.f32 %v776, %v777
        %v779 = vrot.slane %v778, 1
        %v780 = vadd.f32 %v778, %v779
        %v781 = vadd.f32 %v677, %v681
        %v782 = vadd.f32 %v781, %v685
        %v783 = vadd.f32 %v782, %v689
        %v784 = vadd.f32 %v783, %v693
        %v785 = vadd.f32 %v784, %v697
        %v786 = vadd.f32 %v785, %v701
        %v787 = vadd.f32 %v786, %v705
        %v788 = vadd.f32 %v787, %v709
        %v789 = vadd.f32 %v788, %v713
        %v790 = vadd.f32 %v789, %v717
        %v791 = vadd.f32 %v790, %v721
        %v792 = vadd.f32 %v791, %v725
        %v793 = vadd.f32 %v792, %v729
        %v794 = vadd.f32 %v793, %v733
        %v795 = vadd.f32 %v794, %v737
        %v796 = vrot.slane %v795, 4
        %v797 = vadd.f32 %v795, %v796
        %v798 = vrot.slane %v797, 2
        %v799 = vadd.f32 %v797, %v798
        %v800 = vrot.slane %v799, 1
        %v801 = vadd.f32 %v799, %v800
        %v802 = vadd.f32 %v678, %v682
        %v803 = vadd.f32 %v802, %v686
        %v804 = vadd.f32 %v803, %v690
        %v805 = vadd.f32 %v804, %v694
        %v806 = vadd.f32 %v805, %v698
        %v807 = vadd.f32 %v806, %v702
        %v808 = vadd.f32 %v807, %v706
        %v809 = vadd.f32 %v808, %v710
        %v810 = vadd.f32 %v809, %v714
        %v811 = vadd.f32 %v810, %v718
        %v812 = vadd.f32 %v811, %v722
        %v813 = vadd.f32 %v812, %v726
        %v814 = vadd.f32 %v813, %v730
        %v815 = vadd.f32 %v814, %v734
        %v816 = vadd.f32 %v815, %v738
        %v817 = vrot.slane %v816, 4
        %v818 = vadd.f32 %v816, %v817
        %v819 = vrot.slane %v818, 2
        %v820 = vadd.f32 %v818, %v819
        %v821 = vrot.slane %v820, 1
        %v822 = vadd.f32 %v820, %v821
        %v823 = vmul.f32 %v611, 0.0078125
        %v824 = vmul.f32 %v632, 0.0078125
        %v825 = vmul.f32 %v653, 0.0078125
        %v826 = vmul.f32 %v674, 0.0078125
        %v827 = vmul.f32 %v759, 0.0078125
        %v828 = vmul.f32 %v780, 0.0078125
        %v829 = vmul.f32 %v801, 0.0078125
        %v830 = vmul.f32 %v822, 0.0078125
        %v831 = vmul.f32 %v823, %v823
        %v832 = vmul.f32 %v824, %v824
        %v833 = vmul.f32 %v825, %v825
        %v834 = vmul.f32 %v826, %v826
        %v835 = vsub.f32 %v827, %v831
        %v836 = vsub.f32 %v828, %v832
        %v837 = vsub.f32 %v829, %v833
        %v838 = vsub.f32 %v830, %v834
        %v839 = vmax.f32 %v835, 0.0
        %v840 = vmax.f32 %v836, 0.0
        %v841 = vmax.f32 %v837, 0.0
        %v842 = vmax.f32 %v838, 0.0
        %v843 = vadd.f32 %v839, 1e-05
        %v844 = vadd.f32 %v840, 1e-05
        %v845 = vadd.f32 %v841, 1e-05
        %v846 = vadd.f32 %v842, 1e-05
        %v847 = vrsqrt.pop %v843
        %v848 = vmul.f32 %v847, %v843
        %v849 = vmul.f32 %v848, %v847
        %v850 = vmul.f32 0.5, %v849
        %v851 = vsub.f32 1.5, %v850
        %v852 = vmul.f32 %v847, %v851
        %vm853 = vweird.f32 %v843
        %vm854 = vweird.f32 %v847
        %vm855 = vmor %vm853, %vm854
        %v856 = vsel %vm855, %v847, %v852
        %v857 = vrsqrt.pop %v844
        %v858 = vmul.f32 %v857, %v844
        %v859 = vmul.f32 %v858, %v857
        %v860 = vmul.f32 0.5, %v859
        %v861 = vsub.f32 1.5, %v860
        %v862 = vmul.f32 %v857, %v861
        %vm863 = vweird.f32 %v844
        %vm864 = vweird.f32 %v857
        %vm865 = vmor %vm863, %vm864
        %v866 = vsel %vm865, %v857, %v862
        %v867 = vrsqrt.pop %v845
        %v868 = vmul.f32 %v867, %v845
        %v869 = vmul.f32 %v868, %v867
        %v870 = vmul.f32 0.5, %v869
        %v871 = vsub.f32 1.5, %v870
        %v872 = vmul.f32 %v867, %v871
        %vm873 = vweird.f32 %v845
        %vm874 = vweird.f32 %v867
        %vm875 = vmor %vm873, %vm874
        %v876 = vsel %vm875, %v867, %v872
        %v877 = vrsqrt.pop %v846
        %v878 = vmul.f32 %v877, %v846
        %v879 = vmul.f32 %v878, %v877
        %v880 = vmul.f32 0.5, %v879
        %v881 = vsub.f32 1.5, %v880
        %v882 = vmul.f32 %v877, %v881
        %vm883 = vweird.f32 %v846
        %vm884 = vweird.f32 %v877
        %vm885 = vmor %vm883, %vm884
        %v886 = vsel %vm885, %v877, %v882
        %v891 = vrot.slane %v866, 7
        %v892 = vrot.slane %v876, 6
        %v893 = vrot.slane %v886, 5
        %v894 = vsel %vm377, %v856, %v891
        %vm895 = vcmask 1042434
        %v896 = vsel %vm895, %v892, %v893
        %vm897 = vcmask 1041408
        %v898 = vsel %vm897, %v894, %v896
        %v900 = vmul.f32 %v588, %v898
        %v902 = vperm.slane %v900, 0
        %v903 = vperm.slane %v900, 1
        %v904 = vperm.slane %v900, 2
        %v905 = vperm.slane %v900, 3
        %v910 = vmul.f32 %v823, %v902
        %v911 = vmul.f32 %v824, %v903
        %v912 = vmul.f32 %v825, %v904
        %v913 = vmul.f32 %v826, %v905
        %v918 = vrot.slane %v911, 7
        %v919 = vrot.slane %v912, 6
        %v920 = vrot.slane %v913, 5
        %v921 = vsel %vm377, %v910, %v918
        %v922 = vsel %vm895, %v919, %v920
        %v923 = vsel %vm897, %v921, %v922
        %v925 = vsub.f32 %v590, %v923
        %v926 = vmul.f32 %v402, %v902
        %v927 = vmul.f32 %v451, %v903
        %v928 = vmul.f32 %v500, %v904
        %v929 = vmul.f32 %v549, %v905
        %v930 = vmul.f32 %v404, %v902
        %v931 = vmul.f32 %v453, %v903
        %v932 = vmul.f32 %v502, %v904
        %v933 = vmul.f32 %v551, %v905
        %v934 = vmul.f32 %v407, %v902
        %v935 = vmul.f32 %v456, %v903
        %v936 = vmul.f32 %v505, %v904
        %v937 = vmul.f32 %v554, %v905
        %v938 = vmul.f32 %v409, %v902
        %v939 = vmul.f32 %v458, %v903
        %v940 = vmul.f32 %v507, %v904
        %v941 = vmul.f32 %v556, %v905
        %v942 = vmul.f32 %v412, %v902
        %v943 = vmul.f32 %v461, %v903
        %v944 = vmul.f32 %v510, %v904
        %v945 = vmul.f32 %v559, %v905
        %v946 = vmul.f32 %v414, %v902
        %v947 = vmul.f32 %v463, %v903
        %v948 = vmul.f32 %v512, %v904
        %v949 = vmul.f32 %v561, %v905
        %v950 = vmul.f32 %v417, %v902
        %v951 = vmul.f32 %v466, %v903
        %v952 = vmul.f32 %v515, %v904
        %v953 = vmul.f32 %v564, %v905
        %v954 = vmul.f32 %v419, %v902
        %v955 = vmul.f32 %v468, %v903
        %v956 = vmul.f32 %v517, %v904
        %v957 = vmul.f32 %v566, %v905
        %v958 = vmul.f32 %v422, %v902
        %v959 = vmul.f32 %v471, %v903
        %v960 = vmul.f32 %v520, %v904
        %v961 = vmul.f32 %v569, %v905
        %v962 = vmul.f32 %v424, %v902
        %v963 = vmul.f32 %v473, %v903
        %v964 = vmul.f32 %v522, %v904
        %v965 = vmul.f32 %v571, %v905
        %v966 = vmul.f32 %v427, %v902
        %v967 = vmul.f32 %v476, %v903
        %v968 = vmul.f32 %v525, %v904
        %v969 = vmul.f32 %v574, %v905
        %v970 = vmul.f32 %v429, %v902
        %v971 = vmul.f32 %v478, %v903
        %v972 = vmul.f32 %v527, %v904
        %v973 = vmul.f32 %v576, %v905
        %v974 = vmul.f32 %v432, %v902
        %v975 = vmul.f32 %v481, %v903
        %v976 = vmul.f32 %v530, %v904
        %v977 = vmul.f32 %v579, %v905
        %v978 = vmul.f32 %v434, %v902
        %v979 = vmul.f32 %v483, %v903
        %v980 = vmul.f32 %v532, %v904
        %v981 = vmul.f32 %v581, %v905
        %v982 = vmul.f32 %v437, %v902
        %v983 = vmul.f32 %v486, %v903
        %v984 = vmul.f32 %v535, %v904
        %v985 = vmul.f32 %v584, %v905
        %v986 = vmul.f32 %v439, %v902
        %v987 = vmul.f32 %v488, %v903
        %v988 = vmul.f32 %v537, %v904
        %v989 = vmul.f32 %v586, %v905
        %v991 = vperm.slane %v925, 0
        %v992 = vperm.slane %v925, 1
        %v993 = vperm.slane %v925, 2
        %v994 = vperm.slane %v925, 3
        %v999 = vadd.f32 %v926, %v991
        %v1000 = vadd.f32 %v927, %v992
        %v1001 = vadd.f32 %v928, %v993
        %v1002 = vadd.f32 %v929, %v994
        %v1003 = vadd.f32 %v930, %v991
        %v1004 = vadd.f32 %v931, %v992
        %v1005 = vadd.f32 %v932, %v993
        %v1006 = vadd.f32 %v933, %v994
        %v1007 = vadd.f32 %v934, %v991
        %v1008 = vadd.f32 %v935, %v992
        %v1009 = vadd.f32 %v936, %v993
        %v1010 = vadd.f32 %v937, %v994
        %v1011 = vadd.f32 %v938, %v991
        %v1012 = vadd.f32 %v939, %v992
        %v1013 = vadd.f32 %v940, %v993
        %v1014 = vadd.f32 %v941, %v994
        %v1015 = vadd.f32 %v942, %v991
        %v1016 = vadd.f32 %v943, %v992
        %v1017 = vadd.f32 %v944, %v993
        %v1018 = vadd.f32 %v945, %v994
        %v1019 = vadd.f32 %v946, %v991
        %v1020 = vadd.f32 %v947, %v992
        %v1021 = vadd.f32 %v948, %v993
        %v1022 = vadd.f32 %v949, %v994
        %v1023 = vadd.f32 %v950, %v991
        %v1024 = vadd.f32 %v951, %v992
        %v1025 = vadd.f32 %v952, %v993
        %v1026 = vadd.f32 %v953, %v994
        %v1027 = vadd.f32 %v954, %v991
        %v1028 = vadd.f32 %v955, %v992
        %v1029 = vadd.f32 %v956, %v993
        %v1030 = vadd.f32 %v957, %v994
        %v1031 = vadd.f32 %v958, %v991
        %v1032 = vadd.f32 %v959, %v992
        %v1033 = vadd.f32 %v960, %v993
        %v1034 = vadd.f32 %v961, %v994
        %v1035 = vadd.f32 %v962, %v991
        %v1036 = vadd.f32 %v963, %v992
        %v1037 = vadd.f32 %v964, %v993
        %v1038 = vadd.f32 %v965, %v994
        %v1039 = vadd.f32 %v966, %v991
        %v1040 = vadd.f32 %v967, %v992
        %v1041 = vadd.f32 %v968, %v993
        %v1042 = vadd.f32 %v969, %v994
        %v1043 = vadd.f32 %v970, %v991
        %v1044 = vadd.f32 %v971, %v992
        %v1045 = vadd.f32 %v972, %v993
        %v1046 = vadd.f32 %v973, %v994
        %v1047 = vadd.f32 %v974, %v991
        %v1048 = vadd.f32 %v975, %v992
        %v1049 = vadd.f32 %v976, %v993
        %v1050 = vadd.f32 %v977, %v994
        %v1051 = vadd.f32 %v978, %v991
        %v1052 = vadd.f32 %v979, %v992
        %v1053 = vadd.f32 %v980, %v993
        %v1054 = vadd.f32 %v981, %v994
        %v1055 = vadd.f32 %v982, %v991
        %v1056 = vadd.f32 %v983, %v992
        %v1057 = vadd.f32 %v984, %v993
        %v1058 = vadd.f32 %v985, %v994
        %v1059 = vadd.f32 %v986, %v991
        %v1060 = vadd.f32 %v987, %v992
        %v1061 = vadd.f32 %v988, %v993
        %v1062 = vadd.f32 %v989, %v994
        %v1063 = vpack.c.bf16 %v1003, %v999
        %v1064 = vpack.c.bf16 %v1004, %v1000
        %v1065 = vpack.c.bf16 %v1005, %v1001
        %v1066 = vpack.c.bf16 %v1006, %v1002
        %v1067 = vpack.c.bf16 %v1011, %v1007
        %v1068 = vpack.c.bf16 %v1012, %v1008
        %v1069 = vpack.c.bf16 %v1013, %v1009
        %v1070 = vpack.c.bf16 %v1014, %v1010
        %v1071 = vpack.c.bf16 %v1019, %v1015
        %v1072 = vpack.c.bf16 %v1020, %v1016
        %v1073 = vpack.c.bf16 %v1021, %v1017
        %v1074 = vpack.c.bf16 %v1022, %v1018
        %v1075 = vpack.c.bf16 %v1027, %v1023
        %v1076 = vpack.c.bf16 %v1028, %v1024
        %v1077 = vpack.c.bf16 %v1029, %v1025
        %v1078 = vpack.c.bf16 %v1030, %v1026
        %v1079 = vpack.c.bf16 %v1035, %v1031
        %v1080 = vpack.c.bf16 %v1036, %v1032
        %v1081 = vpack.c.bf16 %v1037, %v1033
        %v1082 = vpack.c.bf16 %v1038, %v1034
        %v1083 = vpack.c.bf16 %v1043, %v1039
        %v1084 = vpack.c.bf16 %v1044, %v1040
        %v1085 = vpack.c.bf16 %v1045, %v1041
        %v1086 = vpack.c.bf16 %v1046, %v1042
        %v1087 = vpack.c.bf16 %v1051, %v1047
        %v1088 = vpack.c.bf16 %v1052, %v1048
        %v1089 = vpack.c.bf16 %v1053, %v1049
        %v1090 = vpack.c.bf16 %v1054, %v1050
        %v1091 = vpack.c.bf16 %v1059, %v1055
        %v1092 = vpack.c.bf16 %v1060, %v1056
        %v1093 = vpack.c.bf16 %v1061, %v1057
        %v1094 = vpack.c.bf16 %v1062, %v1058
        %v1095 = vld [vmem:[#allocation2] sm:$0xff]
        %v1096 = vld [vmem:[#allocation2 + $0x8] sm:$0xff]
        %v1097 = vld [vmem:[#allocation2 + $0x10] sm:$0xff]
        %v1098 = vld [vmem:[#allocation2 + $0x18] sm:$0xff]
        %v1099 = vld [vmem:[#allocation2 + $0x20] sm:$0xff]
        %v1100 = vld [vmem:[#allocation2 + $0x28] sm:$0xff]
        %v1101 = vld [vmem:[#allocation2 + $0x30] sm:$0xff]
        %v1102 = vld [vmem:[#allocation2 + $0x38] sm:$0xff]
        %v1103 = vld [vmem:[#allocation2 + $0x40] sm:$0xff]
        %v1104 = vld [vmem:[#allocation2 + $0x48] sm:$0xff]
        %v1105 = vld [vmem:[#allocation2 + $0x50] sm:$0xff]
        %v1106 = vld [vmem:[#allocation2 + $0x58] sm:$0xff]
        %v1107 = vld [vmem:[#allocation2 + $0x60] sm:$0xff]
        %v1108 = vld [vmem:[#allocation2 + $0x68] sm:$0xff]
        %v1109 = vld [vmem:[#allocation2 + $0x70] sm:$0xff]
        %v1110 = vld [vmem:[#allocation2 + $0x78] sm:$0xff]
        %v1111 = vld [vmem:[#allocation2 + $0x80] sm:$0xff]
        %v1112 = vld [vmem:[#allocation2 + $0x88] sm:$0xff]
        %v1113 = vld [vmem:[#allocation2 + $0x90] sm:$0xff]
        %v1114 = vld [vmem:[#allocation2 + $0x98] sm:$0xff]
        %v1115 = vld [vmem:[#allocation2 + $0xa0] sm:$0xff]
        %v1116 = vld [vmem:[#allocation2 + $0xa8] sm:$0xff]
        %v1117 = vld [vmem:[#allocation2 + $0xb0] sm:$0xff]
        %v1118 = vld [vmem:[#allocation2 + $0xb8] sm:$0xff]
        %v1119 = vld [vmem:[#allocation2 + $0xc0] sm:$0xff]
        %v1120 = vld [vmem:[#allocation2 + $0xc8] sm:$0xff]
        %v1121 = vld [vmem:[#allocation2 + $0xd0] sm:$0xff]
        %v1122 = vld [vmem:[#allocation2 + $0xd8] sm:$0xff]
        %v1123 = vld [vmem:[#allocation2 + $0xe0] sm:$0xff]
        %v1124 = vld [vmem:[#allocation2 + $0xe8] sm:$0xff]
        %v1125 = vld [vmem:[#allocation2 + $0xf0] sm:$0xff]
        %v1126 = vld [vmem:[#allocation2 + $0xf8] sm:$0xff]
        %v1127 = vld [vmem:[#allocation2 + $0x100] sm:$0xff]
        %v1128 = vld [vmem:[#allocation2 + $0x108] sm:$0xff]
        %v1129 = vld [vmem:[#allocation2 + $0x110] sm:$0xff]
        %v1130 = vld [vmem:[#allocation2 + $0x118] sm:$0xff]
        %v1131 = vld [vmem:[#allocation2 + $0x120] sm:$0xff]
        %v1132 = vld [vmem:[#allocation2 + $0x128] sm:$0xff]
        %v1133 = vld [vmem:[#allocation2 + $0x130] sm:$0xff]
        %v1134 = vld [vmem:[#allocation2 + $0x138] sm:$0xff]
        %v1135 = vld [vmem:[#allocation2 + $0x140] sm:$0xff]
        %v1136 = vld [vmem:[#allocation2 + $0x148] sm:$0xff]
        %v1137 = vld [vmem:[#allocation2 + $0x150] sm:$0xff]
        %v1138 = vld [vmem:[#allocation2 + $0x158] sm:$0xff]
        %v1139 = vld [vmem:[#allocation2 + $0x160] sm:$0xff]
        %v1140 = vld [vmem:[#allocation2 + $0x168] sm:$0xff]
        %v1141 = vld [vmem:[#allocation2 + $0x170] sm:$0xff]
        %v1142 = vld [vmem:[#allocation2 + $0x178] sm:$0xff]
        %v1143 = vld [vmem:[#allocation2 + $0x180] sm:$0xff]
        %v1144 = vld [vmem:[#allocation2 + $0x188] sm:$0xff]
        %v1145 = vld [vmem:[#allocation2 + $0x190] sm:$0xff]
        %v1146 = vld [vmem:[#allocation2 + $0x198] sm:$0xff]
        %v1147 = vld [vmem:[#allocation2 + $0x1a0] sm:$0xff]
        %v1148 = vld [vmem:[#allocation2 + $0x1a8] sm:$0xff]
        %v1149 = vld [vmem:[#allocation2 + $0x1b0] sm:$0xff]
        %v1150 = vld [vmem:[#allocation2 + $0x1b8] sm:$0xff]
        %v1151 = vld [vmem:[#allocation2 + $0x1c0] sm:$0xff]
        %v1152 = vld [vmem:[#allocation2 + $0x1c8] sm:$0xff]
        %v1153 = vld [vmem:[#allocation2 + $0x1d0] sm:$0xff]
        %v1154 = vld [vmem:[#allocation2 + $0x1d8] sm:$0xff]
        %v1155 = vld [vmem:[#allocation2 + $0x1e0] sm:$0xff]
        %v1156 = vld [vmem:[#allocation2 + $0x1e8] sm:$0xff]
        %v1157 = vld [vmem:[#allocation2 + $0x1f0] sm:$0xff]
        %v1158 = vld [vmem:[#allocation2 + $0x1f8] sm:$0xff]
        %v1223 = vunpack.c.l.b16 %v1095
        %v1224 = vunpack.c.h.b16 %v1095
        %v1225 = vunpack.c.l.b16 %v1096
        %v1226 = vunpack.c.h.b16 %v1096
        %v1227 = vunpack.c.l.b16 %v1097
        %v1228 = vunpack.c.h.b16 %v1097
        %v1229 = vunpack.c.l.b16 %v1098
        %v1230 = vunpack.c.h.b16 %v1098
        %v1231 = vunpack.c.l.b16 %v1099
        %v1232 = vunpack.c.h.b16 %v1099
        %v1233 = vunpack.c.l.b16 %v1100
        %v1234 = vunpack.c.h.b16 %v1100
        %v1235 = vunpack.c.l.b16 %v1101
        %v1236 = vunpack.c.h.b16 %v1101
        %v1237 = vunpack.c.l.b16 %v1102
        %v1238 = vunpack.c.h.b16 %v1102
        %v1239 = vunpack.c.l.b16 %v1103
        %v1240 = vunpack.c.h.b16 %v1103
        %v1241 = vunpack.c.l.b16 %v1104
        %v1242 = vunpack.c.h.b16 %v1104
        %v1243 = vunpack.c.l.b16 %v1105
        %v1244 = vunpack.c.h.b16 %v1105
        %v1245 = vunpack.c.l.b16 %v1106
        %v1246 = vunpack.c.h.b16 %v1106
        %v1247 = vunpack.c.l.b16 %v1107
        %v1248 = vunpack.c.h.b16 %v1107
        %v1249 = vunpack.c.l.b16 %v1108
        %v1250 = vunpack.c.h.b16 %v1108
        %v1251 = vunpack.c.l.b16 %v1109
        %v1252 = vunpack.c.h.b16 %v1109
        %v1253 = vunpack.c.l.b16 %v1110
        %v1254 = vunpack.c.h.b16 %v1110
        %v1255 = vunpack.c.l.b16 %v1111
        %v1256 = vunpack.c.h.b16 %v1111
        %v1257 = vunpack.c.l.b16 %v1112
        %v1258 = vunpack.c.h.b16 %v1112
        %v1259 = vunpack.c.l.b16 %v1113
        %v1260 = vunpack.c.h.b16 %v1113
        %v1261 = vunpack.c.l.b16 %v1114
        %v1262 = vunpack.c.h.b16 %v1114
        %v1263 = vunpack.c.l.b16 %v1115
        %v1264 = vunpack.c.h.b16 %v1115
        %v1265 = vunpack.c.l.b16 %v1116
        %v1266 = vunpack.c.h.b16 %v1116
        %v1267 = vunpack.c.l.b16 %v1117
        %v1268 = vunpack.c.h.b16 %v1117
        %v1269 = vunpack.c.l.b16 %v1118
        %v1270 = vunpack.c.h.b16 %v1118
        %v1271 = vunpack.c.l.b16 %v1119
        %v1272 = vunpack.c.h.b16 %v1119
        %v1273 = vunpack.c.l.b16 %v1120
        %v1274 = vunpack.c.h.b16 %v1120
        %v1275 = vunpack.c.l.b16 %v1121
        %v1276 = vunpack.c.h.b16 %v1121
        %v1277 = vunpack.c.l.b16 %v1122
        %v1278 = vunpack.c.h.b16 %v1122
        %v1279 = vunpack.c.l.b16 %v1123
        %v1280 = vunpack.c.h.b16 %v1123
        %v1281 = vunpack.c.l.b16 %v1124
        %v1282 = vunpack.c.h.b16 %v1124
        %v1283 = vunpack.c.l.b16 %v1125
        %v1284 = vunpack.c.h.b16 %v1125
        %v1285 = vunpack.c.l.b16 %v1126
        %v1286 = vunpack.c.h.b16 %v1126
        %v1287 = vunpack.c.l.b16 %v1127
        %v1288 = vunpack.c.h.b16 %v1127
        %v1289 = vunpack.c.l.b16 %v1128
        %v1290 = vunpack.c.h.b16 %v1128
        %v1291 = vunpack.c.l.b16 %v1129
        %v1292 = vunpack.c.h.b16 %v1129
        %v1293 = vunpack.c.l.b16 %v1130
        %v1294 = vunpack.c.h.b16 %v1130
        %v1295 = vunpack.c.l.b16 %v1131
        %v1296 = vunpack.c.h.b16 %v1131
        %v1297 = vunpack.c.l.b16 %v1132
        %v1298 = vunpack.c.h.b16 %v1132
        %v1299 = vunpack.c.l.b16 %v1133
        %v1300 = vunpack.c.h.b16 %v1133
        %v1301 = vunpack.c.l.b16 %v1134
        %v1302 = vunpack.c.h.b16 %v1134
        %v1303 = vunpack.c.l.b16 %v1135
        %v1304 = vunpack.c.h.b16 %v1135
        %v1305 = vunpack.c.l.b16 %v1136
        %v1306 = vunpack.c.h.b16 %v1136
        %v1307 = vunpack.c.l.b16 %v1137
        %v1308 = vunpack.c.h.b16 %v1137
        %v1309 = vunpack.c.l.b16 %v1138
        %v1310 = vunpack.c.h.b16 %v1138
        %v1311 = vunpack.c.l.b16 %v1139
        %v1312 = vunpack.c.h.b16 %v1139
        %v1313 = vunpack.c.l.b16 %v1140
        %v1314 = vunpack.c.h.b16 %v1140
        %v1315 = vunpack.c.l.b16 %v1141
        %v1316 = vunpack.c.h.b16 %v1141
        %v1317 = vunpack.c.l.b16 %v1142
        %v1318 = vunpack.c.h.b16 %v1142
        %v1319 = vunpack.c.l.b16 %v1143
        %v1320 = vunpack.c.h.b16 %v1143
        %v1321 = vunpack.c.l.b16 %v1144
        %v1322 = vunpack.c.h.b16 %v1144
        %v1323 = vunpack.c.l.b16 %v1145
        %v1324 = vunpack.c.h.b16 %v1145
        %v1325 = vunpack.c.l.b16 %v1146
        %v1326 = vunpack.c.h.b16 %v1146
        %v1327 = vunpack.c.l.b16 %v1147
        %v1328 = vunpack.c.h.b16 %v1147
        %v1329 = vunpack.c.l.b16 %v1148
        %v1330 = vunpack.c.h.b16 %v1148
        %v1331 = vunpack.c.l.b16 %v1149
        %v1332 = vunpack.c.h.b16 %v1149
        %v1333 = vunpack.c.l.b16 %v1150
        %v1334 = vunpack.c.h.b16 %v1150
        %v1335 = vunpack.c.l.b16 %v1151
        %v1336 = vunpack.c.h.b16 %v1151
        %v1337 = vunpack.c.l.b16 %v1152
        %v1338 = vunpack.c.h.b16 %v1152
        %v1339 = vunpack.c.l.b16 %v1153
        %v1340 = vunpack.c.h.b16 %v1153
        %v1341 = vunpack.c.l.b16 %v1154
        %v1342 = vunpack.c.h.b16 %v1154
        %v1343 = vunpack.c.l.b16 %v1155
        %v1344 = vunpack.c.h.b16 %v1155
        %v1345 = vunpack.c.l.b16 %v1156
        %v1346 = vunpack.c.h.b16 %v1156
        %v1347 = vunpack.c.l.b16 %v1157
        %v1348 = vunpack.c.h.b16 %v1157
        %v1349 = vunpack.c.l.b16 %v1158
        %v1350 = vunpack.c.h.b16 %v1158
        %v1351 = vpack.c.b16 %v1225, %v1223
        %v1352 = vpack.c.b16 %v1226, %v1224
        %v1353 = vpack.c.b16 %v1229, %v1227
        %v1354 = vpack.c.b16 %v1230, %v1228
        %v1355 = vpack.c.b16 %v1233, %v1231
        %v1356 = vpack.c.b16 %v1234, %v1232
        %v1357 = vpack.c.b16 %v1237, %v1235
        %v1358 = vpack.c.b16 %v1238, %v1236
        %v1359 = vpack.c.b16 %v1241, %v1239
        %v1360 = vpack.c.b16 %v1242, %v1240
        %v1361 = vpack.c.b16 %v1245, %v1243
        %v1362 = vpack.c.b16 %v1246, %v1244
        %v1363 = vpack.c.b16 %v1249, %v1247
        %v1364 = vpack.c.b16 %v1250, %v1248
        %v1365 = vpack.c.b16 %v1253, %v1251
        %v1366 = vpack.c.b16 %v1254, %v1252
        %v1367 = vpack.c.b16 %v1257, %v1255
        %v1368 = vpack.c.b16 %v1258, %v1256
        %v1369 = vpack.c.b16 %v1261, %v1259
        %v1370 = vpack.c.b16 %v1262, %v1260
        %v1371 = vpack.c.b16 %v1265, %v1263
        %v1372 = vpack.c.b16 %v1266, %v1264
        %v1373 = vpack.c.b16 %v1269, %v1267
        %v1374 = vpack.c.b16 %v1270, %v1268
        %v1375 = vpack.c.b16 %v1273, %v1271
        %v1376 = vpack.c.b16 %v1274, %v1272
        %v1377 = vpack.c.b16 %v1277, %v1275
        %v1378 = vpack.c.b16 %v1278, %v1276
        %v1379 = vpack.c.b16 %v1281, %v1279
        %v1380 = vpack.c.b16 %v1282, %v1280
        %v1381 = vpack.c.b16 %v1285, %v1283
        %v1382 = vpack.c.b16 %v1286, %v1284
        %v1383 = vpack.c.b16 %v1289, %v1287
        %v1384 = vpack.c.b16 %v1290, %v1288
        %v1385 = vpack.c.b16 %v1293, %v1291
        %v1386 = vpack.c.b16 %v1294, %v1292
        %v1387 = vpack.c.b16 %v1297, %v1295
        %v1388 = vpack.c.b16 %v1298, %v1296
        %v1389 = vpack.c.b16 %v1301, %v1299
        %v1390 = vpack.c.b16 %v1302, %v1300
        %v1391 = vpack.c.b16 %v1305, %v1303
        %v1392 = vpack.c.b16 %v1306, %v1304
        %v1393 = vpack.c.b16 %v1309, %v1307
        %v1394 = vpack.c.b16 %v1310, %v1308
        %v1395 = vpack.c.b16 %v1313, %v1311
        %v1396 = vpack.c.b16 %v1314, %v1312
        %v1397 = vpack.c.b16 %v1317, %v1315
        %v1398 = vpack.c.b16 %v1318, %v1316
        %v1399 = vpack.c.b16 %v1321, %v1319
        %v1400 = vpack.c.b16 %v1322, %v1320
        %v1401 = vpack.c.b16 %v1325, %v1323
        %v1402 = vpack.c.b16 %v1326, %v1324
        %v1403 = vpack.c.b16 %v1329, %v1327
        %v1404 = vpack.c.b16 %v1330, %v1328
        %v1405 = vpack.c.b16 %v1333, %v1331
        %v1406 = vpack.c.b16 %v1334, %v1332
        %v1407 = vpack.c.b16 %v1337, %v1335
        %v1408 = vpack.c.b16 %v1338, %v1336
        %v1409 = vpack.c.b16 %v1341, %v1339
        %v1410 = vpack.c.b16 %v1342, %v1340
        %v1411 = vpack.c.b16 %v1345, %v1343
        %v1412 = vpack.c.b16 %v1346, %v1344
        %v1413 = vpack.c.b16 %v1349, %v1347
        %v1414 = vpack.c.b16 %v1350, %v1348
        %1479 = vmatpush.bf16.msra.mxu0 %v1365
        %1480 = vmatpush.bf16.msra.mxu0 %v1363
        %1481 = vmatpush.bf16.msra.mxu0 %v1361
        %1482 = vmatpush.bf16.msra.mxu0 %v1359
        %1483 = vmatpush.bf16.msra.mxu0 %v1357
        %1484 = vmatpush.bf16.msra.mxu0 %v1355
        %1485 = vmatpush.bf16.msra.mxu0 %v1353
        %1486 = vmatpush.bf16.msra.mxu0 %v1351
        %1487 = vmatmul.bf16.gmra.mxu0 %v1063
        %v1488 = vpop.f32.mrf.mxu0
        %v1489 = vadd.f32 0.0, %v1488
        %v1490 = vpop.f32.mrf.mxu0
        %v1491 = vadd.f32 0.0, %v1490
        %1492 = vmatmul.bf16.gmra.mxu0 %v1067
        %v1493 = vpop.f32.mrf.mxu0
        %v1494 = vadd.f32 0.0, %v1493
        %v1495 = vpop.f32.mrf.mxu0
        %v1496 = vadd.f32 0.0, %v1495
        %1497 = vmatmul.bf16.gmra.mxu0 %v1071
        %v1498 = vpop.f32.mrf.mxu0
        %v1499 = vadd.f32 0.0, %v1498
        %v1500 = vpop.f32.mrf.mxu0
        %v1501 = vadd.f32 0.0, %v1500
        %1502 = vmatmul.bf16.gmra.mxu0 %v1075
        %v1503 = vpop.f32.mrf.mxu0
        %v1504 = vadd.f32 0.0, %v1503
        %v1505 = vpop.f32.mrf.mxu0
        %v1506 = vadd.f32 0.0, %v1505
        %1507 = vmatmul.bf16.gmra.mxu0 %v1079
        %v1508 = vpop.f32.mrf.mxu0
        %v1509 = vadd.f32 0.0, %v1508
        %v1510 = vpop.f32.mrf.mxu0
        %v1511 = vadd.f32 0.0, %v1510
        %1512 = vmatmul.bf16.gmra.mxu0 %v1083
        %v1513 = vpop.f32.mrf.mxu0
        %v1514 = vadd.f32 0.0, %v1513
        %v1515 = vpop.f32.mrf.mxu0
        %v1516 = vadd.f32 0.0, %v1515
        %1517 = vmatmul.bf16.gmra.mxu0 %v1087
        %v1518 = vpop.f32.mrf.mxu0
        %v1519 = vadd.f32 0.0, %v1518
        %v1520 = vpop.f32.mrf.mxu0
        %v1521 = vadd.f32 0.0, %v1520
        %1522 = vmatmul.bf16.gmra.mxu0 %v1091
        %v1523 = vpop.f32.mrf.mxu0
        %v1524 = vadd.f32 0.0, %v1523
        %v1525 = vpop.f32.mrf.mxu0
        %v1526 = vadd.f32 0.0, %v1525
        %1527 = vdwg.mxu0
        %1528 = vmatpush.bf16.msra.mxu0 %v1381
        %1529 = vmatpush.bf16.msra.mxu0 %v1379
        %1530 = vmatpush.bf16.msra.mxu0 %v1377
        %1531 = vmatpush.bf16.msra.mxu0 %v1375
        %1532 = vmatpush.bf16.msra.mxu0 %v1373
        %1533 = vmatpush.bf16.msra.mxu0 %v1371
        %1534 = vmatpush.bf16.msra.mxu0 %v1369
        %1535 = vmatpush.bf16.msra.mxu0 %v1367
        %1536 = vmatmul.bf16.gmra.mxu0 %v1064
        %v1537 = vpop.f32.mrf.mxu0
        %v1538 = vadd.f32 %v1489, %v1537
        %v1539 = vpop.f32.mrf.mxu0
        %v1540 = vadd.f32 %v1491, %v1539
        %1541 = vmatmul.bf16.gmra.mxu0 %v1068
        %v1542 = vpop.f32.mrf.mxu0
        %v1543 = vadd.f32 %v1494, %v1542
        %v1544 = vpop.f32.mrf.mxu0
        %v1545 = vadd.f32 %v1496, %v1544
        %1546 = vmatmul.bf16.gmra.mxu0 %v1072
        %v1547 = vpop.f32.mrf.mxu0
        %v1548 = vadd.f32 %v1499, %v1547
        %v1549 = vpop.f32.mrf.mxu0
        %v1550 = vadd.f32 %v1501, %v1549
        %1551 = vmatmul.bf16.gmra.mxu0 %v1076
        %v1552 = vpop.f32.mrf.mxu0
        %v1553 = vadd.f32 %v1504, %v1552
        %v1554 = vpop.f32.mrf.mxu0
        %v1555 = vadd.f32 %v1506, %v1554
        %1556 = vmatmul.bf16.gmra.mxu0 %v1080
        %v1557 = vpop.f32.mrf.mxu0
        %v1558 = vadd.f32 %v1509, %v1557
        %v1559 = vpop.f32.mrf.mxu0
        %v1560 = vadd.f32 %v1511, %v1559
        %1561 = vmatmul.bf16.gmra.mxu0 %v1084
        %v1562 = vpop.f32.mrf.mxu0
        %v1563 = vadd.f32 %v1514, %v1562
        %v1564 = vpop.f32.mrf.mxu0
        %v1565 = vadd.f32 %v1516, %v1564
        %1566 = vmatmul.bf16.gmra.mxu0 %v1088
        %v1567 = vpop.f32.mrf.mxu0
        %v1568 = vadd.f32 %v1519, %v1567
        %v1569 = vpop.f32.mrf.mxu0
        %v1570 = vadd.f32 %v1521, %v1569
        %1571 = vmatmul.bf16.gmra.mxu0 %v1092
        %v1572 = vpop.f32.mrf.mxu0
        %v1573 = vadd.f32 %v1524, %v1572
        %v1574 = vpop.f32.mrf.mxu0
        %v1575 = vadd.f32 %v1526, %v1574
        %1576 = vdwg.mxu0
        %1577 = vmatpush.bf16.msra.mxu0 %v1397
        %1578 = vmatpush.bf16.msra.mxu0 %v1395
        %1579 = vmatpush.bf16.msra.mxu0 %v1393
        %1580 = vmatpush.bf16.msra.mxu0 %v1391
        %1581 = vmatpush.bf16.msra.mxu0 %v1389
        %1582 = vmatpush.bf16.msra.mxu0 %v1387
        %1583 = vmatpush.bf16.msra.mxu0 %v1385
        %1584 = vmatpush.bf16.msra.mxu0 %v1383
        %1585 = vmatmul.bf16.gmra.mxu0 %v1065
        %v1586 = vpop.f32.mrf.mxu0
        %v1587 = vadd.f32 %v1538, %v1586
        %v1588 = vpop.f32.mrf.mxu0
        %v1589 = vadd.f32 %v1540, %v1588
        %1590 = vmatmul.bf16.gmra.mxu0 %v1069
        %v1591 = vpop.f32.mrf.mxu0
        %v1592 = vadd.f32 %v1543, %v1591
        %v1593 = vpop.f32.mrf.mxu0
        %v1594 = vadd.f32 %v1545, %v1593
        %1595 = vmatmul.bf16.gmra.mxu0 %v1073
        %v1596 = vpop.f32.mrf.mxu0
        %v1597 = vadd.f32 %v1548, %v1596
        %v1598 = vpop.f32.mrf.mxu0
        %v1599 = vadd.f32 %v1550, %v1598
        %1600 = vmatmul.bf16.gmra.mxu0 %v1077
        %v1601 = vpop.f32.mrf.mxu0
        %v1602 = vadd.f32 %v1553, %v1601
        %v1603 = vpop.f32.mrf.mxu0
        %v1604 = vadd.f32 %v1555, %v1603
        %1605 = vmatmul.bf16.gmra.mxu0 %v1081
        %v1606 = vpop.f32.mrf.mxu0
        %v1607 = vadd.f32 %v1558, %v1606
        %v1608 = vpop.f32.mrf.mxu0
        %v1609 = vadd.f32 %v1560, %v1608
        %1610 = vmatmul.bf16.gmra.mxu0 %v1085
        %v1611 = vpop.f32.mrf.mxu0
        %v1612 = vadd.f32 %v1563, %v1611
        %v1613 = vpop.f32.mrf.mxu0
        %v1614 = vadd.f32 %v1565, %v1613
        %1615 = vmatmul.bf16.gmra.mxu0 %v1089
        %v1616 = vpop.f32.mrf.mxu0
        %v1617 = vadd.f32 %v1568, %v1616
        %v1618 = vpop.f32.mrf.mxu0
        %v1619 = vadd.f32 %v1570, %v1618
        %1620 = vmatmul.bf16.gmra.mxu0 %v1093
        %v1621 = vpop.f32.mrf.mxu0
        %v1622 = vadd.f32 %v1573, %v1621
        %v1623 = vpop.f32.mrf.mxu0
        %v1624 = vadd.f32 %v1575, %v1623
        %1625 = vdwg.mxu0
        %1626 = vmatpush.bf16.msra.mxu0 %v1413
        %1627 = vmatpush.bf16.msra.mxu0 %v1411
        %1628 = vmatpush.bf16.msra.mxu0 %v1409
        %1629 = vmatpush.bf16.msra.mxu0 %v1407
        %1630 = vmatpush.bf16.msra.mxu0 %v1405
        %1631 = vmatpush.bf16.msra.mxu0 %v1403
        %1632 = vmatpush.bf16.msra.mxu0 %v1401
        %1633 = vmatpush.bf16.msra.mxu0 %v1399
        %1634 = vmatmul.bf16.gmra.mxu0 %v1066
        %v1635 = vpop.f32.mrf.mxu0
        %v1636 = vadd.f32 %v1587, %v1635
        %v1637 = vpop.f32.mrf.mxu0
        %v1638 = vadd.f32 %v1589, %v1637
        %1639 = vmatmul.bf16.gmra.mxu0 %v1070
        %v1640 = vpop.f32.mrf.mxu0
        %v1641 = vadd.f32 %v1592, %v1640
        %v1642 = vpop.f32.mrf.mxu0
        %v1643 = vadd.f32 %v1594, %v1642
        %1644 = vmatmul.bf16.gmra.mxu0 %v1074
        %v1645 = vpop.f32.mrf.mxu0
        %v1646 = vadd.f32 %v1597, %v1645
        %v1647 = vpop.f32.mrf.mxu0
        %v1648 = vadd.f32 %v1599, %v1647
        %1649 = vmatmul.bf16.gmra.mxu0 %v1078
        %v1650 = vpop.f32.mrf.mxu0
        %v1651 = vadd.f32 %v1602, %v1650
        %v1652 = vpop.f32.mrf.mxu0
        %v1653 = vadd.f32 %v1604, %v1652
        %1654 = vmatmul.bf16.gmra.mxu0 %v1082
        %v1655 = vpop.f32.mrf.mxu0
        %v1656 = vadd.f32 %v1607, %v1655
        %v1657 = vpop.f32.mrf.mxu0
        %v1658 = vadd.f32 %v1609, %v1657
        %1659 = vmatmul.bf16.gmra.mxu0 %v1086
        %v1660 = vpop.f32.mrf.mxu0
        %v1661 = vadd.f32 %v1612, %v1660
        %v1662 = vpop.f32.mrf.mxu0
        %v1663 = vadd.f32 %v1614, %v1662
        %1664 = vmatmul.bf16.gmra.mxu0 %v1090
        %v1665 = vpop.f32.mrf.mxu0
        %v1666 = vadd.f32 %v1617, %v1665
        %v1667 = vpop.f32.mrf.mxu0
        %v1668 = vadd.f32 %v1619, %v1667
        %1669 = vmatmul.bf16.gmra.mxu0 %v1094
        %v1670 = vpop.f32.mrf.mxu0
        %v1671 = vadd.f32 %v1622, %v1670
        %v1672 = vpop.f32.mrf.mxu0
        %v1673 = vadd.f32 %v1624, %v1672
        %1674 = vdwg.mxu0
        %1675 = vmatpush.bf16.msra.mxu0 %v1366
        %1676 = vmatpush.bf16.msra.mxu0 %v1364
        %1677 = vmatpush.bf16.msra.mxu0 %v1362
        %1678 = vmatpush.bf16.msra.mxu0 %v1360
        %1679 = vmatpush.bf16.msra.mxu0 %v1358
        %1680 = vmatpush.bf16.msra.mxu0 %v1356
        %1681 = vmatpush.bf16.msra.mxu0 %v1354
        %1682 = vmatpush.bf16.msra.mxu0 %v1352
        %1683 = vmatmul.bf16.gmra.mxu0 %v1063
        %v1684 = vpop.f32.mrf.mxu0
        %v1685 = vadd.f32 0.0, %v1684
        %v1686 = vpop.f32.mrf.mxu0
        %v1687 = vadd.f32 0.0, %v1686
        %1688 = vmatmul.bf16.gmra.mxu0 %v1067
        %v1689 = vpop.f32.mrf.mxu0
        %v1690 = vadd.f32 0.0, %v1689
        %v1691 = vpop.f32.mrf.mxu0
        %v1692 = vadd.f32 0.0, %v1691
        %1693 = vmatmul.bf16.gmra.mxu0 %v1071
        %v1694 = vpop.f32.mrf.mxu0
        %v1695 = vadd.f32 0.0, %v1694
        %v1696 = vpop.f32.mrf.mxu0
        %v1697 = vadd.f32 0.0, %v1696
        %1698 = vmatmul.bf16.gmra.mxu0 %v1075
        %v1699 = vpop.f32.mrf.mxu0
        %v1700 = vadd.f32 0.0, %v1699
        %v1701 = vpop.f32.mrf.mxu0
        %v1702 = vadd.f32 0.0, %v1701
        %1703 = vmatmul.bf16.gmra.mxu0 %v1079
        %v1704 = vpop.f32.mrf.mxu0
        %v1705 = vadd.f32 0.0, %v1704
        %v1706 = vpop.f32.mrf.mxu0
        %v1707 = vadd.f32 0.0, %v1706
        %1708 = vmatmul.bf16.gmra.mxu0 %v1083
        %v1709 = vpop.f32.mrf.mxu0
        %v1710 = vadd.f32 0.0, %v1709
        %v1711 = vpop.f32.mrf.mxu0
        %v1712 = vadd.f32 0.0, %v1711
        %1713 = vmatmul.bf16.gmra.mxu0 %v1087
        %v1714 = vpop.f32.mrf.mxu0
        %v1715 = vadd.f32 0.0, %v1714
        %v1716 = vpop.f32.mrf.mxu0
        %v1717 = vadd.f32 0.0, %v1716
        %1718 = vmatmul.bf16.gmra.mxu0 %v1091
        %v1719 = vpop.f32.mrf.mxu0
        %v1720 = vadd.f32 0.0, %v1719
        %v1721 = vpop.f32.mrf.mxu0
        %v1722 = vadd.f32 0.0, %v1721
        %1723 = vdwg.mxu0
        %1724 = vmatpush.bf16.msra.mxu0 %v1382
        %1725 = vmatpush.bf16.msra.mxu0 %v1380
        %1726 = vmatpush.bf16.msra.mxu0 %v1378
        %1727 = vmatpush.bf16.msra.mxu0 %v1376
        %1728 = vmatpush.bf16.msra.mxu0 %v1374
        %1729 = vmatpush.bf16.msra.mxu0 %v1372
        %1730 = vmatpush.bf16.msra.mxu0 %v1370
        %1731 = vmatpush.bf16.msra.mxu0 %v1368
        %1732 = vmatmul.bf16.gmra.mxu0 %v1064
        %v1733 = vpop.f32.mrf.mxu0
        %v1734 = vadd.f32 %v1685, %v1733
        %v1735 = vpop.f32.mrf.mxu0
        %v1736 = vadd.f32 %v1687, %v1735
        %1737 = vmatmul.bf16.gmra.mxu0 %v1068
        %v1738 = vpop.f32.mrf.mxu0
        %v1739 = vadd.f32 %v1690, %v1738
        %v1740 = vpop.f32.mrf.mxu0
        %v1741 = vadd.f32 %v1692, %v1740
        %1742 = vmatmul.bf16.gmra.mxu0 %v1072
        %v1743 = vpop.f32.mrf.mxu0
        %v1744 = vadd.f32 %v1695, %v1743
        %v1745 = vpop.f32.mrf.mxu0
        %v1746 = vadd.f32 %v1697, %v1745
        %1747 = vmatmul.bf16.gmra.mxu0 %v1076
        %v1748 = vpop.f32.mrf.mxu0
        %v1749 = vadd.f32 %v1700, %v1748
        %v1750 = vpop.f32.mrf.mxu0
        %v1751 = vadd.f32 %v1702, %v1750
        %1752 = vmatmul.bf16.gmra.mxu0 %v1080
        %v1753 = vpop.f32.mrf.mxu0
        %v1754 = vadd.f32 %v1705, %v1753
        %v1755 = vpop.f32.mrf.mxu0
        %v1756 = vadd.f32 %v1707, %v1755
        %1757 = vmatmul.bf16.gmra.mxu0 %v1084
        %v1758 = vpop.f32.mrf.mxu0
        %v1759 = vadd.f32 %v1710, %v1758
        %v1760 = vpop.f32.mrf.mxu0
        %v1761 = vadd.f32 %v1712, %v1760
        %1762 = vmatmul.bf16.gmra.mxu0 %v1088
        %v1763 = vpop.f32.mrf.mxu0
        %v1764 = vadd.f32 %v1715, %v1763
        %v1765 = vpop.f32.mrf.mxu0
        %v1766 = vadd.f32 %v1717, %v1765
        %1767 = vmatmul.bf16.gmra.mxu0 %v1092
        %v1768 = vpop.f32.mrf.mxu0
        %v1769 = vadd.f32 %v1720, %v1768
        %v1770 = vpop.f32.mrf.mxu0
        %v1771 = vadd.f32 %v1722, %v1770
        %1772 = vdwg.mxu0
        %1773 = vmatpush.bf16.msra.mxu0 %v1398
        %1774 = vmatpush.bf16.msra.mxu0 %v1396
        %1775 = vmatpush.bf16.msra.mxu0 %v1394
        %1776 = vmatpush.bf16.msra.mxu0 %v1392
        %1777 = vmatpush.bf16.msra.mxu0 %v1390
        %1778 = vmatpush.bf16.msra.mxu0 %v1388
        %1779 = vmatpush.bf16.msra.mxu0 %v1386
        %1780 = vmatpush.bf16.msra.mxu0 %v1384
        %1781 = vmatmul.bf16.gmra.mxu0 %v1065
        %v1782 = vpop.f32.mrf.mxu0
        %v1783 = vadd.f32 %v1734, %v1782
        %v1784 = vpop.f32.mrf.mxu0
        %v1785 = vadd.f32 %v1736, %v1784
        %1786 = vmatmul.bf16.gmra.mxu0 %v1069
        %v1787 = vpop.f32.mrf.mxu0
        %v1788 = vadd.f32 %v1739, %v1787
        %v1789 = vpop.f32.mrf.mxu0
        %v1790 = vadd.f32 %v1741, %v1789
        %1791 = vmatmul.bf16.gmra.mxu0 %v1073
        %v1792 = vpop.f32.mrf.mxu0
        %v1793 = vadd.f32 %v1744, %v1792
        %v1794 = vpop.f32.mrf.mxu0
        %v1795 = vadd.f32 %v1746, %v1794
        %1796 = vmatmul.bf16.gmra.mxu0 %v1077
        %v1797 = vpop.f32.mrf.mxu0
        %v1798 = vadd.f32 %v1749, %v1797
        %v1799 = vpop.f32.mrf.mxu0
        %v1800 = vadd.f32 %v1751, %v1799
        %1801 = vmatmul.bf16.gmra.mxu0 %v1081
        %v1802 = vpop.f32.mrf.mxu0
        %v1803 = vadd.f32 %v1754, %v1802
        %v1804 = vpop.f32.mrf.mxu0
        %v1805 = vadd.f32 %v1756, %v1804
        %1806 = vmatmul.bf16.gmra.mxu0 %v1085
        %v1807 = vpop.f32.mrf.mxu0
        %v1808 = vadd.f32 %v1759, %v1807
        %v1809 = vpop.f32.mrf.mxu0
        %v1810 = vadd.f32 %v1761, %v1809
        %1811 = vmatmul.bf16.gmra.mxu0 %v1089
        %v1812 = vpop.f32.mrf.mxu0
        %v1813 = vadd.f32 %v1764, %v1812
        %v1814 = vpop.f32.mrf.mxu0
        %v1815 = vadd.f32 %v1766, %v1814
        %1816 = vmatmul.bf16.gmra.mxu0 %v1093
        %v1817 = vpop.f32.mrf.mxu0
        %v1818 = vadd.f32 %v1769, %v1817
        %v1819 = vpop.f32.mrf.mxu0
        %v1820 = vadd.f32 %v1771, %v1819
        %1821 = vdwg.mxu0
        %1822 = vmatpush.bf16.msra.mxu0 %v1414
        %1823 = vmatpush.bf16.msra.mxu0 %v1412
        %1824 = vmatpush.bf16.msra.mxu0 %v1410
        %1825 = vmatpush.bf16.msra.mxu0 %v1408
        %1826 = vmatpush.bf16.msra.mxu0 %v1406
        %1827 = vmatpush.bf16.msra.mxu0 %v1404
        %1828 = vmatpush.bf16.msra.mxu0 %v1402
        %1829 = vmatpush.bf16.msra.mxu0 %v1400
        %1830 = vmatmul.bf16.gmra.mxu0 %v1066
        %v1831 = vpop.f32.mrf.mxu0
        %v1832 = vadd.f32 %v1783, %v1831
        %v1833 = vpop.f32.mrf.mxu0
        %v1834 = vadd.f32 %v1785, %v1833
        %1835 = vmatmul.bf16.gmra.mxu0 %v1070
        %v1836 = vpop.f32.mrf.mxu0
        %v1837 = vadd.f32 %v1788, %v1836
        %v1838 = vpop.f32.mrf.mxu0
        %v1839 = vadd.f32 %v1790, %v1838
        %1840 = vmatmul.bf16.gmra.mxu0 %v1074
        %v1841 = vpop.f32.mrf.mxu0
        %v1842 = vadd.f32 %v1793, %v1841
        %v1843 = vpop.f32.mrf.mxu0
        %v1844 = vadd.f32 %v1795, %v1843
        %1845 = vmatmul.bf16.gmra.mxu0 %v1078
        %v1846 = vpop.f32.mrf.mxu0
        %v1847 = vadd.f32 %v1798, %v1846
        %v1848 = vpop.f32.mrf.mxu0
        %v1849 = vadd.f32 %v1800, %v1848
        %1850 = vmatmul.bf16.gmra.mxu0 %v1082
        %v1851 = vpop.f32.mrf.mxu0
        %v1852 = vadd.f32 %v1803, %v1851
        %v1853 = vpop.f32.mrf.mxu0
        %v1854 = vadd.f32 %v1805, %v1853
        %1855 = vmatmul.bf16.gmra.mxu0 %v1086
        %v1856 = vpop.f32.mrf.mxu0
        %v1857 = vadd.f32 %v1808, %v1856
        %v1858 = vpop.f32.mrf.mxu0
        %v1859 = vadd.f32 %v1810, %v1858
        %1860 = vmatmul.bf16.gmra.mxu0 %v1090
        %v1861 = vpop.f32.mrf.mxu0
        %v1862 = vadd.f32 %v1813, %v1861
        %v1863 = vpop.f32.mrf.mxu0
        %v1864 = vadd.f32 %v1815, %v1863
        %1865 = vmatmul.bf16.gmra.mxu0 %v1094
        %v1866 = vpop.f32.mrf.mxu0
        %v1867 = vadd.f32 %v1818, %v1866
        %v1868 = vpop.f32.mrf.mxu0
        %v1869 = vadd.f32 %v1820, %v1868
        %1870 = vdwg.mxu0
        %s1871 = scalar_lea.vmem %s5, 2
        %v1872 = vld [vmem:[%s1871] ss:$8 sm:$0x3]
        %s1873 = scalar_lea.vmem %s5, 3
        %v1874 = vld [vmem:[%s1873] ss:$8 sm:$0x3]
        %v1875 = vadd.f32 %v1636, %v1638
        %v1876 = vadd.f32 %v1875, %v1641
        %v1877 = vadd.f32 %v1876, %v1643
        %v1878 = vadd.f32 %v1877, %v1646
        %v1879 = vadd.f32 %v1878, %v1648
        %v1880 = vadd.f32 %v1879, %v1651
        %v1881 = vadd.f32 %v1880, %v1653
        %v1882 = vadd.f32 %v1881, %v1656
        %v1883 = vadd.f32 %v1882, %v1658
        %v1884 = vadd.f32 %v1883, %v1661
        %v1885 = vadd.f32 %v1884, %v1663
        %v1886 = vadd.f32 %v1885, %v1666
        %v1887 = vadd.f32 %v1886, %v1668
        %v1888 = vadd.f32 %v1887, %v1671
        %v1889 = vadd.f32 %v1888, %v1673
        %v1890 = vrot.slane %v1889, 4
        %v1891 = vadd.f32 %v1889, %v1890
        %v1892 = vrot.slane %v1891, 2
        %v1893 = vadd.f32 %v1891, %v1892
        %v1894 = vrot.slane %v1893, 1
        %v1895 = vadd.f32 %v1893, %v1894
        %v1896 = vadd.f32 %v1832, %v1834
        %v1897 = vadd.f32 %v1896, %v1837
        %v1898 = vadd.f32 %v1897, %v1839
        %v1899 = vadd.f32 %v1898, %v1842
        %v1900 = vadd.f32 %v1899, %v1844
        %v1901 = vadd.f32 %v1900, %v1847
        %v1902 = vadd.f32 %v1901, %v1849
        %v1903 = vadd.f32 %v1902, %v1852
        %v1904 = vadd.f32 %v1903, %v1854
        %v1905 = vadd.f32 %v1904, %v1857
        %v1906 = vadd.f32 %v1905, %v1859
        %v1907 = vadd.f32 %v1906, %v1862
        %v1908 = vadd.f32 %v1907, %v1864
        %v1909 = vadd.f32 %v1908, %v1867
        %v1910 = vadd.f32 %v1909, %v1869
        %v1911 = vrot.slane %v1910, 4
        %v1912 = vadd.f32 %v1910, %v1911
        %v1913 = vrot.slane %v1912, 2
        %v1914 = vadd.f32 %v1912, %v1913
        %v1915 = vrot.slane %v1914, 1
        %v1916 = vadd.f32 %v1914, %v1915
        %v1917 = vmul.f32 %v1636, %v1636
        %v1918 = vmul.f32 %v1832, %v1832
        %v1919 = vmul.f32 %v1638, %v1638
        %v1920 = vmul.f32 %v1834, %v1834
        %v1921 = vmul.f32 %v1641, %v1641
        %v1922 = vmul.f32 %v1837, %v1837
        %v1923 = vmul.f32 %v1643, %v1643
        %v1924 = vmul.f32 %v1839, %v1839
        %v1925 = vmul.f32 %v1646, %v1646
        %v1926 = vmul.f32 %v1842, %v1842
        %v1927 = vmul.f32 %v1648, %v1648
        %v1928 = vmul.f32 %v1844, %v1844
        %v1929 = vmul.f32 %v1651, %v1651
        %v1930 = vmul.f32 %v1847, %v1847
        %v1931 = vmul.f32 %v1653, %v1653
        %v1932 = vmul.f32 %v1849, %v1849
        %v1933 = vmul.f32 %v1656, %v1656
        %v1934 = vmul.f32 %v1852, %v1852
        %v1935 = vmul.f32 %v1658, %v1658
        %v1936 = vmul.f32 %v1854, %v1854
        %v1937 = vmul.f32 %v1661, %v1661
        %v1938 = vmul.f32 %v1857, %v1857
        %v1939 = vmul.f32 %v1663, %v1663
        %v1940 = vmul.f32 %v1859, %v1859
        %v1941 = vmul.f32 %v1666, %v1666
        %v1942 = vmul.f32 %v1862, %v1862
        %v1943 = vmul.f32 %v1668, %v1668
        %v1944 = vmul.f32 %v1864, %v1864
        %v1945 = vmul.f32 %v1671, %v1671
        %v1946 = vmul.f32 %v1867, %v1867
        %v1947 = vmul.f32 %v1673, %v1673
        %v1948 = vmul.f32 %v1869, %v1869
        %v1949 = vadd.f32 %v1917, %v1919
        %v1950 = vadd.f32 %v1949, %v1921
        %v1951 = vadd.f32 %v1950, %v1923
        %v1952 = vadd.f32 %v1951, %v1925
        %v1953 = vadd.f32 %v1952, %v1927
        %v1954 = vadd.f32 %v1953, %v1929
        %v1955 = vadd.f32 %v1954, %v1931
        %v1956 = vadd.f32 %v1955, %v1933
        %v1957 = vadd.f32 %v1956, %v1935
        %v1958 = vadd.f32 %v1957, %v1937
        %v1959 = vadd.f32 %v1958, %v1939
        %v1960 = vadd.f32 %v1959, %v1941
        %v1961 = vadd.f32 %v1960, %v1943
        %v1962 = vadd.f32 %v1961, %v1945
        %v1963 = vadd.f32 %v1962, %v1947
        %v1964 = vrot.slane %v1963, 4
        %v1965 = vadd.f32 %v1963, %v1964
        %v1966 = vrot.slane %v1965, 2
        %v1967 = vadd.f32 %v1965, %v1966
        %v1968 = vrot.slane %v1967, 1
        %v1969 = vadd.f32 %v1967, %v1968
        %v1970 = vadd.f32 %v1918, %v1920
        %v1971 = vadd.f32 %v1970, %v1922
        %v1972 = vadd.f32 %v1971, %v1924
        %v1973 = vadd.f32 %v1972, %v1926
        %v1974 = vadd.f32 %v1973, %v1928
        %v1975 = vadd.f32 %v1974, %v1930
        %v1976 = vadd.f32 %v1975, %v1932
        %v1977 = vadd.f32 %v1976, %v1934
        %v1978 = vadd.f32 %v1977, %v1936
        %v1979 = vadd.f32 %v1978, %v1938
        %v1980 = vadd.f32 %v1979, %v1940
        %v1981 = vadd.f32 %v1980, %v1942
        %v1982 = vadd.f32 %v1981, %v1944
        %v1983 = vadd.f32 %v1982, %v1946
        %v1984 = vadd.f32 %v1983, %v1948
        %v1985 = vrot.slane %v1984, 4
        %v1986 = vadd.f32 %v1984, %v1985
        %v1987 = vrot.slane %v1986, 2
        %v1988 = vadd.f32 %v1986, %v1987
        %v1989 = vrot.slane %v1988, 1
        %v1990 = vadd.f32 %v1988, %v1989
        %v1991 = vmul.f32 %v1895, 0.0078125
        %v1992 = vmul.f32 %v1916, 0.0078125
        %v1993 = vmul.f32 %v1969, 0.0078125
        %v1994 = vmul.f32 %v1990, 0.0078125
        %v1995 = vmul.f32 %v1991, %v1991
        %v1996 = vmul.f32 %v1992, %v1992
        %v1997 = vsub.f32 %v1993, %v1995
        %v1998 = vsub.f32 %v1994, %v1996
        %v1999 = vmax.f32 %v1997, 0.0
        %v2000 = vmax.f32 %v1998, 0.0
        %v2001 = vadd.f32 %v1999, 1e-05
        %v2002 = vadd.f32 %v2000, 1e-05
        %v2003 = vrsqrt.pop %v2001
        %v2004 = vmul.f32 %v2003, %v2001
        %v2005 = vmul.f32 %v2004, %v2003
        %v2006 = vmul.f32 0.5, %v2005
        %v2007 = vsub.f32 1.5, %v2006
        %v2008 = vmul.f32 %v2003, %v2007
        %vm2009 = vweird.f32 %v2001
        %vm2010 = vweird.f32 %v2003
        %vm2011 = vmor %vm2009, %vm2010
        %v2012 = vsel %vm2011, %v2003, %v2008
        %v2013 = vrsqrt.pop %v2002
        %v2014 = vmul.f32 %v2013, %v2002
        %v2015 = vmul.f32 %v2014, %v2013
        %v2016 = vmul.f32 0.5, %v2015
        %v2017 = vsub.f32 1.5, %v2016
        %v2018 = vmul.f32 %v2013, %v2017
        %vm2019 = vweird.f32 %v2002
        %vm2020 = vweird.f32 %v2013
        %vm2021 = vmor %vm2019, %vm2020
        %v2022 = vsel %vm2021, %v2013, %v2018
        %v2025 = vrot.slane %v2022, 7
        %v2026 = vsel %vm377, %v2012, %v2025
        %v2028 = vmul.f32 %v1872, %v2026
        %v2030 = vperm.slane %v2028, 0
        %v2031 = vperm.slane %v2028, 1
        %v2034 = vmul.f32 %v1991, %v2030
        %v2035 = vmul.f32 %v1992, %v2031
        %v2038 = vrot.slane %v2035, 7
        %v2039 = vsel %vm377, %v2034, %v2038
        %v2041 = vsub.f32 %v1874, %v2039
        %v2042 = vmul.f32 %v1636, %v2030
        %v2043 = vmul.f32 %v1832, %v2031
        %v2044 = vmul.f32 %v1638, %v2030
        %v2045 = vmul.f32 %v1834, %v2031
        %v2046 = vmul.f32 %v1641, %v2030
        %v2047 = vmul.f32 %v1837, %v2031
        %v2048 = vmul.f32 %v1643, %v2030
        %v2049 = vmul.f32 %v1839, %v2031
        %v2050 = vmul.f32 %v1646, %v2030
        %v2051 = vmul.f32 %v1842, %v2031
        %v2052 = vmul.f32 %v1648, %v2030
        %v2053 = vmul.f32 %v1844, %v2031
        %v2054 = vmul.f32 %v1651, %v2030
        %v2055 = vmul.f32 %v1847, %v2031
        %v2056 = vmul.f32 %v1653, %v2030
        %v2057 = vmul.f32 %v1849, %v2031
        %v2058 = vmul.f32 %v1656, %v2030
        %v2059 = vmul.f32 %v1852, %v2031
        %v2060 = vmul.f32 %v1658, %v2030
        %v2061 = vmul.f32 %v1854, %v2031
        %v2062 = vmul.f32 %v1661, %v2030
        %v2063 = vmul.f32 %v1857, %v2031
        %v2064 = vmul.f32 %v1663, %v2030
        %v2065 = vmul.f32 %v1859, %v2031
        %v2066 = vmul.f32 %v1666, %v2030
        %v2067 = vmul.f32 %v1862, %v2031
        %v2068 = vmul.f32 %v1668, %v2030
        %v2069 = vmul.f32 %v1864, %v2031
        %v2070 = vmul.f32 %v1671, %v2030
        %v2071 = vmul.f32 %v1867, %v2031
        %v2072 = vmul.f32 %v1673, %v2030
        %v2073 = vmul.f32 %v1869, %v2031
        %v2075 = vperm.slane %v2041, 0
        %v2076 = vperm.slane %v2041, 1
        %v2079 = vadd.f32 %v2042, %v2075
        %v2080 = vadd.f32 %v2043, %v2076
        %v2081 = vadd.f32 %v2044, %v2075
        %v2082 = vadd.f32 %v2045, %v2076
        %v2083 = vadd.f32 %v2046, %v2075
        %v2084 = vadd.f32 %v2047, %v2076
        %v2085 = vadd.f32 %v2048, %v2075
        %v2086 = vadd.f32 %v2049, %v2076
        %v2087 = vadd.f32 %v2050, %v2075
        %v2088 = vadd.f32 %v2051, %v2076
        %v2089 = vadd.f32 %v2052, %v2075
        %v2090 = vadd.f32 %v2053, %v2076
        %v2091 = vadd.f32 %v2054, %v2075
        %v2092 = vadd.f32 %v2055, %v2076
        %v2093 = vadd.f32 %v2056, %v2075
        %v2094 = vadd.f32 %v2057, %v2076
        %v2095 = vadd.f32 %v2058, %v2075
        %v2096 = vadd.f32 %v2059, %v2076
        %v2097 = vadd.f32 %v2060, %v2075
        %v2098 = vadd.f32 %v2061, %v2076
        %v2099 = vadd.f32 %v2062, %v2075
        %v2100 = vadd.f32 %v2063, %v2076
        %v2101 = vadd.f32 %v2064, %v2075
        %v2102 = vadd.f32 %v2065, %v2076
        %v2103 = vadd.f32 %v2066, %v2075
        %v2104 = vadd.f32 %v2067, %v2076
        %v2105 = vadd.f32 %v2068, %v2075
        %v2106 = vadd.f32 %v2069, %v2076
        %v2107 = vadd.f32 %v2070, %v2075
        %v2108 = vadd.f32 %v2071, %v2076
        %v2109 = vadd.f32 %v2072, %v2075
        %v2110 = vadd.f32 %v2073, %v2076
        %v2111 = vpack.c.bf16 %v2081, %v2079
        %v2112 = vpack.c.bf16 %v2082, %v2080
        %v2113 = vpack.c.bf16 %v2085, %v2083
        %v2114 = vpack.c.bf16 %v2086, %v2084
        %v2115 = vpack.c.bf16 %v2089, %v2087
        %v2116 = vpack.c.bf16 %v2090, %v2088
        %v2117 = vpack.c.bf16 %v2093, %v2091
        %v2118 = vpack.c.bf16 %v2094, %v2092
        %v2119 = vpack.c.bf16 %v2097, %v2095
        %v2120 = vpack.c.bf16 %v2098, %v2096
        %v2121 = vpack.c.bf16 %v2101, %v2099
        %v2122 = vpack.c.bf16 %v2102, %v2100
        %v2123 = vpack.c.bf16 %v2105, %v2103
        %v2124 = vpack.c.bf16 %v2106, %v2104
        %v2125 = vpack.c.bf16 %v2109, %v2107
        %v2126 = vpack.c.bf16 %v2110, %v2108
        %v2127 = vld [vmem:[%s3] sm:$0xf]
        %v2128 = vld [vmem:[%s3 + $0x4] sm:$0xf]
        %v2129 = vld [vmem:[%s3 + $0x8] sm:$0xf]
        %v2130 = vld [vmem:[%s3 + $0xc] sm:$0xf]
        %v2131 = vld [vmem:[%s3 + $0x10] sm:$0xf]
        %v2132 = vld [vmem:[%s3 + $0x14] sm:$0xf]
        %v2133 = vld [vmem:[%s3 + $0x18] sm:$0xf]
        %v2134 = vld [vmem:[%s3 + $0x1c] sm:$0xf]
        %v2135 = vld [vmem:[%s3 + $0x20] sm:$0xf]
        %v2136 = vld [vmem:[%s3 + $0x24] sm:$0xf]
        %v2137 = vld [vmem:[%s3 + $0x28] sm:$0xf]
        %v2138 = vld [vmem:[%s3 + $0x2c] sm:$0xf]
        %v2139 = vld [vmem:[%s3 + $0x30] sm:$0xf]
        %v2140 = vld [vmem:[%s3 + $0x34] sm:$0xf]
        %v2141 = vld [vmem:[%s3 + $0x38] sm:$0xf]
        %v2142 = vld [vmem:[%s3 + $0x3c] sm:$0xf]
        %v2143 = vld [vmem:[%s3 + $0x40] sm:$0xf]
        %v2144 = vld [vmem:[%s3 + $0x44] sm:$0xf]
        %v2145 = vld [vmem:[%s3 + $0x48] sm:$0xf]
        %v2146 = vld [vmem:[%s3 + $0x4c] sm:$0xf]
        %v2147 = vld [vmem:[%s3 + $0x50] sm:$0xf]
        %v2148 = vld [vmem:[%s3 + $0x54] sm:$0xf]
        %v2149 = vld [vmem:[%s3 + $0x58] sm:$0xf]
        %v2150 = vld [vmem:[%s3 + $0x5c] sm:$0xf]
        %v2151 = vld [vmem:[%s3 + $0x60] sm:$0xf]
        %v2152 = vld [vmem:[%s3 + $0x64] sm:$0xf]
        %v2153 = vld [vmem:[%s3 + $0x68] sm:$0xf]
        %v2154 = vld [vmem:[%s3 + $0x6c] sm:$0xf]
        %v2155 = vld [vmem:[%s3 + $0x70] sm:$0xf]
        %v2156 = vld [vmem:[%s3 + $0x74] sm:$0xf]
        %v2157 = vld [vmem:[%s3 + $0x78] sm:$0xf]
        %v2158 = vld [vmem:[%s3 + $0x7c] sm:$0xf]
        %v2191 = vunpack.c.l.b16 %v2127
        %v2192 = vunpack.c.l.b16 %v2128
        %v2193 = vunpack.c.l.b16 %v2129
        %v2194 = vunpack.c.l.b16 %v2130
        %v2195 = vunpack.c.l.b16 %v2131
        %v2196 = vunpack.c.l.b16 %v2132
        %v2197 = vunpack.c.l.b16 %v2133
        %v2198 = vunpack.c.l.b16 %v2134
        %v2199 = vunpack.c.l.b16 %v2135
        %v2200 = vunpack.c.l.b16 %v2136
        %v2201 = vunpack.c.l.b16 %v2137
        %v2202 = vunpack.c.l.b16 %v2138
        %v2203 = vunpack.c.l.b16 %v2139
        %v2204 = vunpack.c.l.b16 %v2140
        %v2205 = vunpack.c.l.b16 %v2141
        %v2206 = vunpack.c.l.b16 %v2142
        %v2207 = vunpack.c.l.b16 %v2143
        %v2208 = vunpack.c.l.b16 %v2144
        %v2209 = vunpack.c.l.b16 %v2145
        %v2210 = vunpack.c.l.b16 %v2146
        %v2211 = vunpack.c.l.b16 %v2147
        %v2212 = vunpack.c.l.b16 %v2148
        %v2213 = vunpack.c.l.b16 %v2149
        %v2214 = vunpack.c.l.b16 %v2150
        %v2215 = vunpack.c.l.b16 %v2151
        %v2216 = vunpack.c.l.b16 %v2152
        %v2217 = vunpack.c.l.b16 %v2153
        %v2218 = vunpack.c.l.b16 %v2154
        %v2219 = vunpack.c.l.b16 %v2155
        %v2220 = vunpack.c.l.b16 %v2156
        %v2221 = vunpack.c.l.b16 %v2157
        %v2222 = vunpack.c.l.b16 %v2158
        %v2223 = vpack.c.b16 %v2192, %v2191
        %v2224 = vpack.c.b16 %v2194, %v2193
        %v2225 = vpack.c.b16 %v2196, %v2195
        %v2226 = vpack.c.b16 %v2198, %v2197
        %v2227 = vpack.c.b16 %v2200, %v2199
        %v2228 = vpack.c.b16 %v2202, %v2201
        %v2229 = vpack.c.b16 %v2204, %v2203
        %v2230 = vpack.c.b16 %v2206, %v2205
        %v2231 = vpack.c.b16 %v2208, %v2207
        %v2232 = vpack.c.b16 %v2210, %v2209
        %v2233 = vpack.c.b16 %v2212, %v2211
        %v2234 = vpack.c.b16 %v2214, %v2213
        %v2235 = vpack.c.b16 %v2216, %v2215
        %v2236 = vpack.c.b16 %v2218, %v2217
        %v2237 = vpack.c.b16 %v2220, %v2219
        %v2238 = vpack.c.b16 %v2222, %v2221
        %2255 = vmatpush.bf16.msra.mxu0 %v2230
        %2256 = vmatpush.bf16.msra.mxu0 %v2229
        %2257 = vmatpush.bf16.msra.mxu0 %v2228
        %2258 = vmatpush.bf16.msra.mxu0 %v2227
        %2259 = vmatpush.bf16.msra.mxu0 %v2226
        %2260 = vmatpush.bf16.msra.mxu0 %v2225
        %2261 = vmatpush.bf16.msra.mxu0 %v2224
        %2262 = vmatpush.bf16.msra.mxu0 %v2223
        %2263 = vmatmul.bf16.gmra.mxu0 %v2111
        %v2264 = vpop.f32.mrf.mxu0
        %v2265 = vadd.f32 0.0, %v2264
        %v2266 = vpop.f32.mrf.mxu0
        %v2267 = vadd.f32 0.0, %v2266
        %2268 = vmatmul.bf16.gmra.mxu0 %v2113
        %v2269 = vpop.f32.mrf.mxu0
        %v2270 = vadd.f32 0.0, %v2269
        %v2271 = vpop.f32.mrf.mxu0
        %v2272 = vadd.f32 0.0, %v2271
        %2273 = vmatmul.bf16.gmra.mxu0 %v2115
        %v2274 = vpop.f32.mrf.mxu0
        %v2275 = vadd.f32 0.0, %v2274
        %v2276 = vpop.f32.mrf.mxu0
        %v2277 = vadd.f32 0.0, %v2276
        %2278 = vmatmul.bf16.gmra.mxu0 %v2117
        %v2279 = vpop.f32.mrf.mxu0
        %v2280 = vadd.f32 0.0, %v2279
        %v2281 = vpop.f32.mrf.mxu0
        %v2282 = vadd.f32 0.0, %v2281
        %2283 = vmatmul.bf16.gmra.mxu0 %v2119
        %v2284 = vpop.f32.mrf.mxu0
        %v2285 = vadd.f32 0.0, %v2284
        %v2286 = vpop.f32.mrf.mxu0
        %v2287 = vadd.f32 0.0, %v2286
        %2288 = vmatmul.bf16.gmra.mxu0 %v2121
        %v2289 = vpop.f32.mrf.mxu0
        %v2290 = vadd.f32 0.0, %v2289
        %v2291 = vpop.f32.mrf.mxu0
        %v2292 = vadd.f32 0.0, %v2291
        %2293 = vmatmul.bf16.gmra.mxu0 %v2123
        %v2294 = vpop.f32.mrf.mxu0
        %v2295 = vadd.f32 0.0, %v2294
        %v2296 = vpop.f32.mrf.mxu0
        %v2297 = vadd.f32 0.0, %v2296
        %2298 = vmatmul.bf16.gmra.mxu0 %v2125
        %v2299 = vpop.f32.mrf.mxu0
        %v2300 = vadd.f32 0.0, %v2299
        %v2301 = vpop.f32.mrf.mxu0
        %v2302 = vadd.f32 0.0, %v2301
        %2303 = vdwg.mxu0
        %2304 = vmatpush.bf16.msra.mxu0 %v2238
        %2305 = vmatpush.bf16.msra.mxu0 %v2237
        %2306 = vmatpush.bf16.msra.mxu0 %v2236
        %2307 = vmatpush.bf16.msra.mxu0 %v2235
        %2308 = vmatpush.bf16.msra.mxu0 %v2234
        %2309 = vmatpush.bf16.msra.mxu0 %v2233
        %2310 = vmatpush.bf16.msra.mxu0 %v2232
        %2311 = vmatpush.bf16.msra.mxu0 %v2231
        %2312 = vmatmul.bf16.gmra.mxu0 %v2112
        %v2313 = vpop.f32.mrf.mxu0
        %v2314 = vadd.f32 %v2265, %v2313
        %v2315 = vpop.f32.mrf.mxu0
        %v2316 = vadd.f32 %v2267, %v2315
        %2317 = vmatmul.bf16.gmra.mxu0 %v2114
        %v2318 = vpop.f32.mrf.mxu0
        %v2319 = vadd.f32 %v2270, %v2318
        %v2320 = vpop.f32.mrf.mxu0
        %v2321 = vadd.f32 %v2272, %v2320
        %2322 = vmatmul.bf16.gmra.mxu0 %v2116
        %v2323 = vpop.f32.mrf.mxu0
        %v2324 = vadd.f32 %v2275, %v2323
        %v2325 = vpop.f32.mrf.mxu0
        %v2326 = vadd.f32 %v2277, %v2325
        %2327 = vmatmul.bf16.gmra.mxu0 %v2118
        %v2328 = vpop.f32.mrf.mxu0
        %v2329 = vadd.f32 %v2280, %v2328
        %v2330 = vpop.f32.mrf.mxu0
        %v2331 = vadd.f32 %v2282, %v2330
        %2332 = vmatmul.bf16.gmra.mxu0 %v2120
        %v2333 = vpop.f32.mrf.mxu0
        %v2334 = vadd.f32 %v2285, %v2333
        %v2335 = vpop.f32.mrf.mxu0
        %v2336 = vadd.f32 %v2287, %v2335
        %2337 = vmatmul.bf16.gmra.mxu0 %v2122
        %v2338 = vpop.f32.mrf.mxu0
        %v2339 = vadd.f32 %v2290, %v2338
        %v2340 = vpop.f32.mrf.mxu0
        %v2341 = vadd.f32 %v2292, %v2340
        %2342 = vmatmul.bf16.gmra.mxu0 %v2124
        %v2343 = vpop.f32.mrf.mxu0
        %v2344 = vadd.f32 %v2295, %v2343
        %v2345 = vpop.f32.mrf.mxu0
        %v2346 = vadd.f32 %v2297, %v2345
        %2347 = vmatmul.bf16.gmra.mxu0 %v2126
        %v2348 = vpop.f32.mrf.mxu0
        %v2349 = vadd.f32 %v2300, %v2348
        %v2350 = vpop.f32.mrf.mxu0
        %v2351 = vadd.f32 %v2302, %v2350
        %2352 = vdwg.mxu0
        %v2353 = vld [vmem:[%s5 + $0x4] ss:$0 sm:$0xff]
        %v2354 = vld [vmem:[%s5 + $0x5] ss:$0 sm:$0xff]
        %v2355 = vadd.f32 %v2314, %v2316
        %v2356 = vadd.f32 %v2355, %v2319
        %v2357 = vadd.f32 %v2356, %v2321
        %v2358 = vadd.f32 %v2357, %v2324
        %v2359 = vadd.f32 %v2358, %v2326
        %v2360 = vadd.f32 %v2359, %v2329
        %v2361 = vadd.f32 %v2360, %v2331
        %v2362 = vadd.f32 %v2361, %v2334
        %v2363 = vadd.f32 %v2362, %v2336
        %v2364 = vadd.f32 %v2363, %v2339
        %v2365 = vadd.f32 %v2364, %v2341
        %v2366 = vadd.f32 %v2365, %v2344
        %v2367 = vadd.f32 %v2366, %v2346
        %v2368 = vadd.f32 %v2367, %v2349
        %v2369 = vadd.f32 %v2368, %v2351
        %v2370 = vrot.slane %v2369, 4
        %v2371 = vadd.f32 %v2369, %v2370
        %v2372 = vrot.slane %v2371, 2
        %v2373 = vadd.f32 %v2371, %v2372
        %v2374 = vrot.slane %v2373, 1
        %v2375 = vadd.f32 %v2373, %v2374
        %v2376 = vmul.f32 %v2314, %v2314
        %v2377 = vmul.f32 %v2316, %v2316
        %v2378 = vmul.f32 %v2319, %v2319
        %v2379 = vmul.f32 %v2321, %v2321
        %v2380 = vmul.f32 %v2324, %v2324
        %v2381 = vmul.f32 %v2326, %v2326
        %v2382 = vmul.f32 %v2329, %v2329
        %v2383 = vmul.f32 %v2331, %v2331
        %v2384 = vmul.f32 %v2334, %v2334
        %v2385 = vmul.f32 %v2336, %v2336
        %v2386 = vmul.f32 %v2339, %v2339
        %v2387 = vmul.f32 %v2341, %v2341
        %v2388 = vmul.f32 %v2344, %v2344
        %v2389 = vmul.f32 %v2346, %v2346
        %v2390 = vmul.f32 %v2349, %v2349
        %v2391 = vmul.f32 %v2351, %v2351
        %v2392 = vadd.f32 %v2376, %v2377
        %v2393 = vadd.f32 %v2392, %v2378
        %v2394 = vadd.f32 %v2393, %v2379
        %v2395 = vadd.f32 %v2394, %v2380
        %v2396 = vadd.f32 %v2395, %v2381
        %v2397 = vadd.f32 %v2396, %v2382
        %v2398 = vadd.f32 %v2397, %v2383
        %v2399 = vadd.f32 %v2398, %v2384
        %v2400 = vadd.f32 %v2399, %v2385
        %v2401 = vadd.f32 %v2400, %v2386
        %v2402 = vadd.f32 %v2401, %v2387
        %v2403 = vadd.f32 %v2402, %v2388
        %v2404 = vadd.f32 %v2403, %v2389
        %v2405 = vadd.f32 %v2404, %v2390
        %v2406 = vadd.f32 %v2405, %v2391
        %v2407 = vrot.slane %v2406, 4
        %v2408 = vadd.f32 %v2406, %v2407
        %v2409 = vrot.slane %v2408, 2
        %v2410 = vadd.f32 %v2408, %v2409
        %v2411 = vrot.slane %v2410, 1
        %v2412 = vadd.f32 %v2410, %v2411
        %v2413 = vmul.f32 %v2375, 0.0078125
        %v2414 = vmul.f32 %v2412, 0.0078125
        %v2415 = vmul.f32 %v2413, %v2413
        %v2416 = vsub.f32 %v2414, %v2415
        %v2417 = vmax.f32 %v2416, 0.0
        %v2418 = vadd.f32 %v2417, 1e-05
        %v2419 = vrsqrt.pop %v2418
        %v2420 = vmul.f32 %v2419, %v2418
        %v2421 = vmul.f32 %v2420, %v2419
        %v2422 = vmul.f32 0.5, %v2421
        %v2423 = vsub.f32 1.5, %v2422
        %v2424 = vmul.f32 %v2419, %v2423
        %vm2425 = vweird.f32 %v2418
        %vm2426 = vweird.f32 %v2419
        %vm2427 = vmor %vm2425, %vm2426
        %v2428 = vsel %vm2427, %v2419, %v2424
        %v2429 = vmul.f32 %v2353, %v2428
        %v2430 = vmul.f32 %v2413, %v2429
        %v2431 = vsub.f32 %v2354, %v2430
        %v2432 = vmul.f32 %v2314, %v2429
        %v2433 = vmul.f32 %v2316, %v2429
        %v2434 = vmul.f32 %v2319, %v2429
        %v2435 = vmul.f32 %v2321, %v2429
        %v2436 = vmul.f32 %v2324, %v2429
        %v2437 = vmul.f32 %v2326, %v2429
        %v2438 = vmul.f32 %v2329, %v2429
        %v2439 = vmul.f32 %v2331, %v2429
        %v2440 = vmul.f32 %v2334, %v2429
        %v2441 = vmul.f32 %v2336, %v2429
        %v2442 = vmul.f32 %v2339, %v2429
        %v2443 = vmul.f32 %v2341, %v2429
        %v2444 = vmul.f32 %v2344, %v2429
        %v2445 = vmul.f32 %v2346, %v2429
        %v2446 = vmul.f32 %v2349, %v2429
        %v2447 = vmul.f32 %v2351, %v2429
        %v2448 = vadd.f32 %v2432, %v2431
        %v2449 = vadd.f32 %v2433, %v2431
        %v2450 = vadd.f32 %v2434, %v2431
        %v2451 = vadd.f32 %v2435, %v2431
        %v2452 = vadd.f32 %v2436, %v2431
        %v2453 = vadd.f32 %v2437, %v2431
        %v2454 = vadd.f32 %v2438, %v2431
        %v2455 = vadd.f32 %v2439, %v2431
        %v2456 = vadd.f32 %v2440, %v2431
        %v2457 = vadd.f32 %v2441, %v2431
        %v2458 = vadd.f32 %v2442, %v2431
        %v2459 = vadd.f32 %v2443, %v2431
        %v2460 = vadd.f32 %v2444, %v2431
        %v2461 = vadd.f32 %v2445, %v2431
        %v2462 = vadd.f32 %v2446, %v2431
        %v2463 = vadd.f32 %v2447, %v2431
        %v2464 = vpack.c.bf16 %v2449, %v2448
        %v2465 = vpack.c.bf16 %v2451, %v2450
        %v2466 = vpack.c.bf16 %v2453, %v2452
        %v2467 = vpack.c.bf16 %v2455, %v2454
        %v2468 = vpack.c.bf16 %v2457, %v2456
        %v2469 = vpack.c.bf16 %v2459, %v2458
        %v2470 = vpack.c.bf16 %v2461, %v2460
        %v2471 = vpack.c.bf16 %v2463, %v2462
        %v2472 = vld [vmem:[%s4] sm:$0xf]
        %v2473 = vld [vmem:[%s4 + $0x4] sm:$0xf]
        %v2474 = vld [vmem:[%s4 + $0x8] sm:$0xf]
        %v2475 = vld [vmem:[%s4 + $0xc] sm:$0xf]
        %v2476 = vld [vmem:[%s4 + $0x10] sm:$0xf]
        %v2477 = vld [vmem:[%s4 + $0x14] sm:$0xf]
        %v2478 = vld [vmem:[%s4 + $0x18] sm:$0xf]
        %v2479 = vld [vmem:[%s4 + $0x1c] sm:$0xf]
        %v2480 = vld [vmem:[%s4 + $0x20] sm:$0xf]
        %v2481 = vld [vmem:[%s4 + $0x24] sm:$0xf]
        %v2482 = vld [vmem:[%s4 + $0x28] sm:$0xf]
        %v2483 = vld [vmem:[%s4 + $0x2c] sm:$0xf]
        %v2484 = vld [vmem:[%s4 + $0x30] sm:$0xf]
        %v2485 = vld [vmem:[%s4 + $0x34] sm:$0xf]
        %v2486 = vld [vmem:[%s4 + $0x38] sm:$0xf]
        %v2487 = vld [vmem:[%s4 + $0x3c] sm:$0xf]
        %v2488 = vld [vmem:[%s5 + $0x6] ss:$0 sm:$0xff]
        %v2505 = vunpack.c.l.b16 %v2472
        %v2506 = vunpack.c.l.b16 %v2473
        %v2507 = vunpack.c.l.b16 %v2474
        %v2508 = vunpack.c.l.b16 %v2475
        %v2509 = vunpack.c.l.b16 %v2476
        %v2510 = vunpack.c.l.b16 %v2477
        %v2511 = vunpack.c.l.b16 %v2478
        %v2512 = vunpack.c.l.b16 %v2479
        %v2513 = vunpack.c.l.b16 %v2480
        %v2514 = vunpack.c.l.b16 %v2481
        %v2515 = vunpack.c.l.b16 %v2482
        %v2516 = vunpack.c.l.b16 %v2483
        %v2517 = vunpack.c.l.b16 %v2484
        %v2518 = vunpack.c.l.b16 %v2485
        %v2519 = vunpack.c.l.b16 %v2486
        %v2520 = vunpack.c.l.b16 %v2487
        %v2521 = vpack.c.b16 %v2506, %v2505
        %v2522 = vpack.c.b16 %v2508, %v2507
        %v2523 = vpack.c.b16 %v2510, %v2509
        %v2524 = vpack.c.b16 %v2512, %v2511
        %v2525 = vpack.c.b16 %v2514, %v2513
        %v2526 = vpack.c.b16 %v2516, %v2515
        %v2527 = vpack.c.b16 %v2518, %v2517
        %v2528 = vpack.c.b16 %v2520, %v2519
        %2537 = vmatpush.bf16.msra.mxu0 %v2528
        %2538 = vmatpush.bf16.msra.mxu0 %v2527
        %2539 = vmatpush.bf16.msra.mxu0 %v2526
        %2540 = vmatpush.bf16.msra.mxu0 %v2525
        %2541 = vmatpush.bf16.msra.mxu0 %v2524
        %2542 = vmatpush.bf16.msra.mxu0 %v2523
        %2543 = vmatpush.bf16.msra.mxu0 %v2522
        %2544 = vmatpush.bf16.msra.mxu0 %v2521
        %2545 = vmatmul.bf16.gmra.mxu0 %v2464
        %v2546 = vpop.f32.mrf.mxu0
        %v2547 = vadd.f32 %v2488, %v2546
        %v2548 = vpop.f32.mrf.mxu0
        %v2549 = vadd.f32 %v2488, %v2548
        %2550 = vmatmul.bf16.gmra.mxu0 %v2465
        %v2551 = vpop.f32.mrf.mxu0
        %v2552 = vadd.f32 %v2488, %v2551
        %v2553 = vpop.f32.mrf.mxu0
        %v2554 = vadd.f32 %v2488, %v2553
        %2555 = vmatmul.bf16.gmra.mxu0 %v2466
        %v2556 = vpop.f32.mrf.mxu0
        %v2557 = vadd.f32 %v2488, %v2556
        %v2558 = vpop.f32.mrf.mxu0
        %v2559 = vadd.f32 %v2488, %v2558
        %2560 = vmatmul.bf16.gmra.mxu0 %v2467
        %v2561 = vpop.f32.mrf.mxu0
        %v2562 = vadd.f32 %v2488, %v2561
        %v2563 = vpop.f32.mrf.mxu0
        %v2564 = vadd.f32 %v2488, %v2563
        %2565 = vmatmul.bf16.gmra.mxu0 %v2468
        %v2566 = vpop.f32.mrf.mxu0
        %v2567 = vadd.f32 %v2488, %v2566
        %v2568 = vpop.f32.mrf.mxu0
        %v2569 = vadd.f32 %v2488, %v2568
        %2570 = vmatmul.bf16.gmra.mxu0 %v2469
        %v2571 = vpop.f32.mrf.mxu0
        %v2572 = vadd.f32 %v2488, %v2571
        %v2573 = vpop.f32.mrf.mxu0
        %v2574 = vadd.f32 %v2488, %v2573
        %2575 = vmatmul.bf16.gmra.mxu0 %v2470
        %v2576 = vpop.f32.mrf.mxu0
        %v2577 = vadd.f32 %v2488, %v2576
        %v2578 = vpop.f32.mrf.mxu0
        %v2579 = vadd.f32 %v2488, %v2578
        %2580 = vmatmul.bf16.gmra.mxu0 %v2471
        %v2581 = vpop.f32.mrf.mxu0
        %v2582 = vadd.f32 %v2488, %v2581
        %v2583 = vpop.f32.mrf.mxu0
        %v2584 = vadd.f32 %v2488, %v2583
        %2585 = vdwg.mxu0
        %v2586 = vmax.f32 %v2547, 0.0
        %v2587 = vmax.f32 %v2549, 0.0
        %v2588 = vmax.f32 %v2552, 0.0
        %v2589 = vmax.f32 %v2554, 0.0
        %v2590 = vmax.f32 %v2557, 0.0
        %v2591 = vmax.f32 %v2559, 0.0
        %v2592 = vmax.f32 %v2562, 0.0
        %v2593 = vmax.f32 %v2564, 0.0
        %v2594 = vmax.f32 %v2567, 0.0
        %v2595 = vmax.f32 %v2569, 0.0
        %v2596 = vmax.f32 %v2572, 0.0
        %v2597 = vmax.f32 %v2574, 0.0
        %v2598 = vmax.f32 %v2577, 0.0
        %v2599 = vmax.f32 %v2579, 0.0
        %v2600 = vmax.f32 %v2582, 0.0
        %v2601 = vmax.f32 %v2584, 0.0
        %2602 = vst [vmem:[%s261] sm:$0xff] %v2586
        %2603 = vst [vmem:[%s261 + $0x8] sm:$0xff] %v2587
        %2604 = vst [vmem:[%s261 + $0x10] sm:$0xff] %v2588
        %2605 = vst [vmem:[%s261 + $0x18] sm:$0xff] %v2589
        %2606 = vst [vmem:[%s261 + $0x20] sm:$0xff] %v2590
        %2607 = vst [vmem:[%s261 + $0x28] sm:$0xff] %v2591
        %2608 = vst [vmem:[%s261 + $0x30] sm:$0xff] %v2592
        %2609 = vst [vmem:[%s261 + $0x38] sm:$0xff] %v2593
        %2610 = vst [vmem:[%s261 + $0x40] sm:$0xff] %v2594
        %2611 = vst [vmem:[%s261 + $0x48] sm:$0xff] %v2595
        %2612 = vst [vmem:[%s261 + $0x50] sm:$0xff] %v2596
        %2613 = vst [vmem:[%s261 + $0x58] sm:$0xff] %v2597
        %2614 = vst [vmem:[%s261 + $0x60] sm:$0xff] %v2598
        %2615 = vst [vmem:[%s261 + $0x68] sm:$0xff] %v2599
        %2616 = vst [vmem:[%s261 + $0x70] sm:$0xff] %v2600
        %2617 = vst [vmem:[%s261 + $0x78] sm:$0xff] %v2601
        %s2618 = sand.u32 %s160, 1
        %s2619 = scalar_lea.sflag [#allocation4], %s2618
        %s2620 = sand.u32 %s160, 1
        %s2621 = smul.addr %s2620, 128
        %s2622 = scalar_lea.vmem [#allocation5], %s2621
        // Predicated region
        $region49: #{tpu_custom_call.1} parent=43 // pred_check
          %p2623 = pneg %p170
        $region50: #{tpu_custom_call.1} parent=43 // pred_check_branch
          %2625 = sbr.rel (%p2623) target = $region52
        $region51: #{tpu_custom_call.1} parent=43 // pred_region
          %2627 = vsyncadd %s2619, 0
          %s2628 = smul.addr %s21, 16
          %s2629 = smul.addr %s2628, 8
          %s2630 = scalar_lea.hbm %s6, %s2629
          %s2631 = sshll.u32 %s2622, 4
          %s2632 = int_to_ptr.vmem [resolvable:$true] %s2631
          %s2633 = sshll.u32 %s2630, 4
          %s2634 = int_to_ptr.hbm [resolvable:$true] %s2633
          %2639 = dma.vmem_to_hbm [thread:$0]  %s2632, 2048, %s2634, %s2619, 128, 128, 8
        $region52: #{tpu_custom_call.1} parent=43 // pred_fallthru
          _
      $region44: #{tpu_custom_call.1} parent=5 // pred_fallthru
        _
      %p2640 = scmp.le.s32.totalorder 2, %s16
      // Predicated region
      $region53: #{tpu_custom_call.1} parent=5 // pred_check
        %p2641 = pneg %p2640
      $region54: #{tpu_custom_call.1} parent=5 // pred_check_branch
        %2643 = sbr.rel (%p2641) target = $region56
      $region55: #{tpu_custom_call.1} parent=5 // pred_region
        %s2644 = ssub.s32 %s16, 2
        // Predicated region
        $region57: #{tpu_custom_call.1} parent=55 // pred_check
          %p2645 = pneg %p176
        $region58: #{tpu_custom_call.1} parent=55 // pred_check_branch
          %2647 = sbr.rel (%p2645) target = $region60
        $region59: #{tpu_custom_call.1} parent=55 // pred_region
          %s2648 = sand.u32 %s161, 1
          %s2649 = scalar_lea.sflag [#allocation4], %s2648
          %s2650 = sand.u32 %s161, 1
          %s2651 = smul.addr %s2650, 128
          %s2652 = scalar_lea.vmem [#allocation5], %s2651
          %2654 = dma.done %s2649, 2048
        $region60: #{tpu_custom_call.1} parent=55 // pred_fallthru
          _
      $region56: #{tpu_custom_call.1} parent=5 // pred_fallthru
        _
    $region6: #{tpu_custom_call.1} parent=1 // loop_footer
      %s20 = sadd.s32 1, %s16
    $region7: #{tpu_custom_call.1} parent=1 // loop_footer_branch
      %15 = sbr.rel target = $region3
    $region8: #{tpu_custom_call.1} parent=1 // loop_exit
      _
    %2655 = vsyncpa [#allocation3], 1
    %s2656 = scalar_lea.sflag [#allocation3], 1
    %2657 = vsyncpa %s2656, 1
    %2658 = vsyncpa [#allocation4], 1
    %s2659 = scalar_lea.sflag [#allocation4], 1
    %2660 = vsyncpa %s2659, 1

</llo_original>
